<compile_context>
chip_gen: v6e
topology: v6e:2x2x1
jax: 0.10.0
libtpu: 0.0.40
codegen_flags: <defaults>
</compile_context>

<pallas_src>
import jax
import jax.numpy as jnp
from jax.experimental import pallas as pl
from jax.experimental.pallas import tpu as pltpu


def relu_conv1x1_kernel(x_ref, w_ref, o_ref):
    # x_ref: [C_in, HW]   (one batch item, channels-major == native NCHW slab)
    # w_ref: [C_out, C_in] (native PyTorch OI layout, no transpose)
    # o_ref: [C_out, HW]
    x = jnp.maximum(x_ref[...], 0.0)                       # fused ReLU (VPU)
    o_ref[...] = jnp.dot(
        w_ref[...], x, preferred_element_type=jnp.float32  # MXU matmul
    ).astype(o_ref.dtype)


def relu_conv1x1(x_nchw, weight_oihw):
    """x_nchw: [N, C_in, H, W], weight_oihw: [C_out, C_in, 1, 1] -> [N, C_out, H, W]"""
    N, C_in, H, W = x_nchw.shape
    C_out = weight_oihw.shape[0]
    HW = H * W

    # Contiguous reshapes only (no data movement / no transposes).
    x_mat = x_nchw.reshape(N, C_in, HW)                # [N, C_in, HW]
    w_mat = weight_oihw.reshape(C_out, C_in)           # [C_out, C_in]

    flops = 2 * N * C_out * C_in * HW
    bytes_accessed = (x_mat.size + w_mat.size + N * C_out * HW) * 4

    out_mat = pl.pallas_call(
        relu_conv1x1_kernel,
        out_shape=jax.ShapeDtypeStruct((N, C_out, HW), x_mat.dtype),
        grid_spec=pltpu.PrefetchScalarGridSpec(
            num_scalar_prefetch=0,
            grid=(N,),
            in_specs=[
                # One full batch item per grid step; batch dim squeezed out.
                pl.BlockSpec((None, C_in, HW), lambda n: (n, 0, 0)),
                # Weight fully resident across all grid steps.
                pl.BlockSpec((C_out, C_in), lambda n: (0, 0)),
            ],
            out_specs=pl.BlockSpec((None, C_out, HW), lambda n: (n, 0, 0)),
        ),
        compiler_params=pltpu.CompilerParams(
            # Batch axis is independent -> allow megacore sharding if N > 1.
            dimension_semantics=("parallel",),
        ),
        cost_estimate=pl.CostEstimate(
            flops=flops, transcendentals=0, bytes_accessed=bytes_accessed
        ),
    )(x_mat, w_mat)

    # Contiguous reshape back to NCHW (free).
    return out_mat.reshape(N, C_out, H, W)


if __name__ == "__main__":
    # Shapes implied by the module: Conv2d(1632, 128, 1x1), input [1, 1632, 14, 14].
    N, C_in, H, W = 1, 1632, 14, 14
    C_out = 128

    key = jax.random.PRNGKey(0)
    kx, kw = jax.random.split(key)

    x = jax.random.normal(kx, (N, C_in, H, W), dtype=jnp.float32)
    # Deterministic synthetic weight (roughly kaiming-ish scale for a 1x1 conv).
    weight = jax.random.normal(kw, (C_out, C_in, 1, 1), dtype=jnp.float32) * (1.0 / (C_in ** 0.5))

    out = relu_conv1x1(x, weight)
    out = jax.block_until_ready(out)

    # Reference check in plain JAX (1x1 conv == channel matmul after ReLU).
    x_relu = jnp.maximum(x, 0.0)
    ref = jnp.einsum("nchw,oc->nohw", x_relu, weight[:, :, 0, 0])
    assert out.shape == (N, C_out, H, W), out.shape
    assert jnp.allclose(out, ref, atol=1e-4, rtol=1e-4)

    print("KERNEL_OK")
</pallas_src>

<mosaic_0001>
module attributes {stable_mosaic.version = 11 : i64} {
  func.func @relu_conv1x1_kernel(%arg0: i32, %arg1: memref<1x1632x196xf32, #tpu.memory_space<vmem>>, %arg2: memref<128x1632xf32, #tpu.memory_space<vmem>>, %arg3: memref<1x128x196xf32, #tpu.memory_space<vmem>>) attributes {dimension_semantics = [#tpu.dimension_semantics<parallel>], iteration_bounds = array<i64: 1>, scalar_prefetch = 0 : i64, scratch_operands = 0 : i64, tpu.core_type = #tpu.core_type<tc>, window_params = [{transform_indices = @transform_0, window_bounds = array<i64: 1, 1632, 196>}, {pipeline_mode = #tpu.pipeline_mode<synchronous>, transform_indices = @transform_1, window_bounds = array<i64: 128, 1632>}, {transform_indices = @transform_2, window_bounds = array<i64: 1, 128, 196>}]} {
    %c0 = arith.constant 0 : index
    %c0_0 = arith.constant 0 : index
    %c0_1 = arith.constant 0 : index
    %0 = vector.load %arg1[%c0, %c0_0, %c0_1] : memref<1x1632x196xf32, #tpu.memory_space<vmem>>, vector<1x1632x196xf32>
    %1 = vector.shape_cast %0 : vector<1x1632x196xf32> to vector<1632x196xf32>
    %cst = arith.constant 0.000000e+00 : f32
    %2 = vector.broadcast %cst : f32 to vector<1632x196xf32>
    %3 = arith.maximumf %1, %2 : vector<1632x196xf32>
    %c0_2 = arith.constant 0 : index
    %c0_3 = arith.constant 0 : index
    %4 = vector.load %arg2[%c0_2, %c0_3] : memref<128x1632xf32, #tpu.memory_space<vmem>>, vector<128x1632xf32>
    %cst_4 = arith.constant dense<0.000000e+00> : vector<128x196xf32>
    %5 = tpu.matmul %4, %3, %cst_4 {dimension_numbers = #tpu.dot_dimension_numbers<[1], [0], [0], [1], [0, 0, 1, 1], [], []>} : vector<128x1632xf32>, vector<1632x196xf32>, vector<128x196xf32> -> vector<128x196xf32>
    %c0_5 = arith.constant 0 : index
    %c0_6 = arith.constant 0 : index
    %c0_7 = arith.constant 0 : index
    %6 = vector.load %arg3[%c0_5, %c0_6, %c0_7] : memref<1x128x196xf32, #tpu.memory_space<vmem>>, vector<1x128x196xf32>
    %7 = vector.shape_cast %6 : vector<1x128x196xf32> to vector<128x196xf32>
    %8 = vector.shape_cast %5 : vector<128x196xf32> to vector<1x128x196xf32>
    tpu.vector_store %arg3[%c0_5, %c0_6, %c0_7], %8 {strides = array<i32>} : memref<1x128x196xf32, #tpu.memory_space<vmem>>, vector<1x128x196xf32>,
    return
  }
  func.func @transform_0(%arg0: i32) -> (i32, i32, i32) {
    %c0_i32 = arith.constant 0 : i32
    %c0_i32_0 = arith.constant 0 : i32
    %c0_i32_1 = arith.constant 0 : i32
    return %arg0, %c0_i32, %c0_i32_0 : i32, i32, i32
  }
  func.func @transform_1(%arg0: i32) -> (i32, i32) {
    %c0_i32 = arith.constant 0 : i32
    %c0_i32_0 = arith.constant 0 : i32
    %c0_i32_1 = arith.constant 0 : i32
    return %c0_i32, %c0_i32_0 : i32, i32
  }
  func.func @transform_2(%arg0: i32) -> (i32, i32, i32) {
    %c0_i32 = arith.constant 0 : i32
    %c0_i32_0 = arith.constant 0 : i32
    %c0_i32_1 = arith.constant 0 : i32
    return %arg0, %c0_i32, %c0_i32_0 : i32, i32, i32
  }
}

</mosaic_0001>

<llo_original>
// kernel: tpu_custom_call.1
$region0: #{tpu_custom_call.1}
  #allocation0 [shape = 'u32[]', space=smem, size = 0x4, offset = 0x4, fixed_abs, tag = 'smem constant byte address 0x4 - core index']
  #allocation1 [shape = 'u32[144,128]{1,0:T(1,128)}', space=vmem, size = 0x12000, scoped, tag = 'internal scratch']
  %s0 = inlined_call_operand.vmem [shape: f32[1,1632,196], index: 0, kind: input, shape index: {}]
  %s1 = inlined_call_operand.vmem [shape: f32[128,1632], index: 1, kind: input, shape index: {}]
  %s2 = inlined_call_operand.vmem [shape: f32[1,128,196], index: 2, kind: output, shape index: {}]
  %s3 = sld [smem:[#allocation0]]
  $region18: #{tpu_custom_call.1} parent=0
    _
  %s5 = ssub.s32 1, %s3
  %s6 = scalar_select 0, %s5, %s3
  // Predicated region
  $region2: #{tpu_custom_call.1} parent=0 // pred_check
    _
  $region3: #{tpu_custom_call.1} parent=0 // pred_check_branch
    %8 = sbr.rel (0) target = $region5
  $region4: #{tpu_custom_call.1} parent=0 // pred_region
    _
  $region5: #{tpu_custom_call.1} parent=0 // pred_fallthru
    _
  // Predicated region
  $region6: #{tpu_custom_call.1} parent=0 // pred_check
    _
  $region7: #{tpu_custom_call.1} parent=0 // pred_check_branch
    %10 = sbr.rel (0) target = $region9
  $region8: #{tpu_custom_call.1} parent=0 // pred_region
    _
  $region9: #{tpu_custom_call.1} parent=0 // pred_fallthru
    _
  %v11 = vld [vmem:[%s0] sm:$0xff]
  %v12 = vld [vmem:[%s0 + $0x8] sm:$0xff]
  %v13 = vld [vmem:[%s0 + $0x10] sm:$0xff]
  %v14 = vld [vmem:[%s0 + $0x18] sm:$0xff]
  %v15 = vld [vmem:[%s0 + $0x20] sm:$0xff]
  %v16 = vld [vmem:[%s0 + $0x28] sm:$0xff]
  %v17 = vld [vmem:[%s0 + $0x30] sm:$0xff]
  %v18 = vld [vmem:[%s0 + $0x38] sm:$0xff]
  %v19 = vld [vmem:[%s0 + $0x40] sm:$0xff]
  %v20 = vld [vmem:[%s0 + $0x48] sm:$0xff]
  %v21 = vld [vmem:[%s0 + $0x50] sm:$0xff]
  %v22 = vld [vmem:[%s0 + $0x58] sm:$0xff]
  %v23 = vld [vmem:[%s0 + $0x60] sm:$0xff]
  %v24 = vld [vmem:[%s0 + $0x68] sm:$0xff]
  %v25 = vld [vmem:[%s0 + $0x70] sm:$0xff]
  %v26 = vld [vmem:[%s0 + $0x78] sm:$0xff]
  %v27 = vld [vmem:[%s0 + $0x80] sm:$0xff]
  %v28 = vld [vmem:[%s0 + $0x88] sm:$0xff]
  %v29 = vld [vmem:[%s0 + $0x90] sm:$0xff]
  %v30 = vld [vmem:[%s0 + $0x98] sm:$0xff]
  %v31 = vld [vmem:[%s0 + $0xa0] sm:$0xff]
  %v32 = vld [vmem:[%s0 + $0xa8] sm:$0xff]
  %v33 = vld [vmem:[%s0 + $0xb0] sm:$0xff]
  %v34 = vld [vmem:[%s0 + $0xb8] sm:$0xff]
  %v35 = vld [vmem:[%s0 + $0xc0] sm:$0xff]
  %v36 = vld [vmem:[%s0 + $0xc8] sm:$0xff]
  %v37 = vld [vmem:[%s0 + $0xd0] sm:$0xff]
  %v38 = vld [vmem:[%s0 + $0xd8] sm:$0xff]
  %v39 = vld [vmem:[%s0 + $0xe0] sm:$0xff]
  %v40 = vld [vmem:[%s0 + $0xe8] sm:$0xff]
  %v41 = vld [vmem:[%s0 + $0xf0] sm:$0xff]
  %v42 = vld [vmem:[%s0 + $0xf8] sm:$0xff]
  %v43 = vld [vmem:[%s0 + $0x100] sm:$0xff]
  %v44 = vld [vmem:[%s0 + $0x108] sm:$0xff]
  %v45 = vld [vmem:[%s0 + $0x110] sm:$0xff]
  %v46 = vld [vmem:[%s0 + $0x118] sm:$0xff]
  %v47 = vld [vmem:[%s0 + $0x120] sm:$0xff]
  %v48 = vld [vmem:[%s0 + $0x128] sm:$0xff]
  %v49 = vld [vmem:[%s0 + $0x130] sm:$0xff]
  %v50 = vld [vmem:[%s0 + $0x138] sm:$0xff]
  %v51 = vld [vmem:[%s0 + $0x140] sm:$0xff]
  %v52 = vld [vmem:[%s0 + $0x148] sm:$0xff]
  %v53 = vld [vmem:[%s0 + $0x150] sm:$0xff]
  %v54 = vld [vmem:[%s0 + $0x158] sm:$0xff]
  %v55 = vld [vmem:[%s0 + $0x160] sm:$0xff]
  %v56 = vld [vmem:[%s0 + $0x168] sm:$0xff]
  %v57 = vld [vmem:[%s0 + $0x170] sm:$0xff]
  %v58 = vld [vmem:[%s0 + $0x178] sm:$0xff]
  %v59 = vld [vmem:[%s0 + $0x180] sm:$0xff]
  %v60 = vld [vmem:[%s0 + $0x188] sm:$0xff]
  %v61 = vld [vmem:[%s0 + $0x190] sm:$0xff]
  %v62 = vld [vmem:[%s0 + $0x198] sm:$0xff]
  %v63 = vld [vmem:[%s0 + $0x1a0] sm:$0xff]
  %v64 = vld [vmem:[%s0 + $0x1a8] sm:$0xff]
  %v65 = vld [vmem:[%s0 + $0x1b0] sm:$0xff]
  %v66 = vld [vmem:[%s0 + $0x1b8] sm:$0xff]
  %v67 = vld [vmem:[%s0 + $0x1c0] sm:$0xff]
  %v68 = vld [vmem:[%s0 + $0x1c8] sm:$0xff]
  %v69 = vld [vmem:[%s0 + $0x1d0] sm:$0xff]
  %v70 = vld [vmem:[%s0 + $0x1d8] sm:$0xff]
  %v71 = vld [vmem:[%s0 + $0x1e0] sm:$0xff]
  %v72 = vld [vmem:[%s0 + $0x1e8] sm:$0xff]
  %v73 = vld [vmem:[%s0 + $0x1f0] sm:$0xff]
  %v74 = vld [vmem:[%s0 + $0x1f8] sm:$0xff]
  %v75 = vld [vmem:[%s0 + $0x200] sm:$0xff]
  %v76 = vld [vmem:[%s0 + $0x208] sm:$0xff]
  %v77 = vld [vmem:[%s0 + $0x210] sm:$0xff]
  %v78 = vld [vmem:[%s0 + $0x218] sm:$0xff]
  %v79 = vld [vmem:[%s0 + $0x220] sm:$0xff]
  %v80 = vld [vmem:[%s0 + $0x228] sm:$0xff]
  %v81 = vld [vmem:[%s0 + $0x230] sm:$0xff]
  %v82 = vld [vmem:[%s0 + $0x238] sm:$0xff]
  %v83 = vld [vmem:[%s0 + $0x240] sm:$0xff]
  %v84 = vld [vmem:[%s0 + $0x248] sm:$0xff]
  %v85 = vld [vmem:[%s0 + $0x250] sm:$0xff]
  %v86 = vld [vmem:[%s0 + $0x258] sm:$0xff]
  %v87 = vld [vmem:[%s0 + $0x260] sm:$0xff]
  %v88 = vld [vmem:[%s0 + $0x268] sm:$0xff]
  %v89 = vld [vmem:[%s0 + $0x270] sm:$0xff]
  %v90 = vld [vmem:[%s0 + $0x278] sm:$0xff]
  %v91 = vld [vmem:[%s0 + $0x280] sm:$0xff]
  %v92 = vld [vmem:[%s0 + $0x288] sm:$0xff]
  %v93 = vld [vmem:[%s0 + $0x290] sm:$0xff]
  %v94 = vld [vmem:[%s0 + $0x298] sm:$0xff]
  %v95 = vld [vmem:[%s0 + $0x2a0] sm:$0xff]
  %v96 = vld [vmem:[%s0 + $0x2a8] sm:$0xff]
  %v97 = vld [vmem:[%s0 + $0x2b0] sm:$0xff]
  %v98 = vld [vmem:[%s0 + $0x2b8] sm:$0xff]
  %v99 = vld [vmem:[%s0 + $0x2c0] sm:$0xff]
  %v100 = vld [vmem:[%s0 + $0x2c8] sm:$0xff]
  %v101 = vld [vmem:[%s0 + $0x2d0] sm:$0xff]
  %v102 = vld [vmem:[%s0 + $0x2d8] sm:$0xff]
  %v103 = vld [vmem:[%s0 + $0x2e0] sm:$0xff]
  %v104 = vld [vmem:[%s0 + $0x2e8] sm:$0xff]
  %v105 = vld [vmem:[%s0 + $0x2f0] sm:$0xff]
  %v106 = vld [vmem:[%s0 + $0x2f8] sm:$0xff]
  %v107 = vld [vmem:[%s0 + $0x300] sm:$0xff]
  %v108 = vld [vmem:[%s0 + $0x308] sm:$0xff]
  %v109 = vld [vmem:[%s0 + $0x310] sm:$0xff]
  %v110 = vld [vmem:[%s0 + $0x318] sm:$0xff]
  %v111 = vld [vmem:[%s0 + $0x320] sm:$0xff]
  %v112 = vld [vmem:[%s0 + $0x328] sm:$0xff]
  %v113 = vld [vmem:[%s0 + $0x330] sm:$0xff]
  %v114 = vld [vmem:[%s0 + $0x338] sm:$0xff]
  %v115 = vld [vmem:[%s0 + $0x340] sm:$0xff]
  %v116 = vld [vmem:[%s0 + $0x348] sm:$0xff]
  %v117 = vld [vmem:[%s0 + $0x350] sm:$0xff]
  %v118 = vld [vmem:[%s0 + $0x358] sm:$0xff]
  %v119 = vld [vmem:[%s0 + $0x360] sm:$0xff]
  %v120 = vld [vmem:[%s0 + $0x368] sm:$0xff]
  %v121 = vld [vmem:[%s0 + $0x370] sm:$0xff]
  %v122 = vld [vmem:[%s0 + $0x378] sm:$0xff]
  %v123 = vld [vmem:[%s0 + $0x380] sm:$0xff]
  %v124 = vld [vmem:[%s0 + $0x388] sm:$0xff]
  %v125 = vld [vmem:[%s0 + $0x390] sm:$0xff]
  %v126 = vld [vmem:[%s0 + $0x398] sm:$0xff]
  %v127 = vld [vmem:[%s0 + $0x3a0] sm:$0xff]
  %v128 = vld [vmem:[%s0 + $0x3a8] sm:$0xff]
  %v129 = vld [vmem:[%s0 + $0x3b0] sm:$0xff]
  %v130 = vld [vmem:[%s0 + $0x3b8] sm:$0xff]
  %v131 = vld [vmem:[%s0 + $0x3c0] sm:$0xff]
  %v132 = vld [vmem:[%s0 + $0x3c8] sm:$0xff]
  %v133 = vld [vmem:[%s0 + $0x3d0] sm:$0xff]
  %v134 = vld [vmem:[%s0 + $0x3d8] sm:$0xff]
  %v135 = vld [vmem:[%s0 + $0x3e0] sm:$0xff]
  %v136 = vld [vmem:[%s0 + $0x3e8] sm:$0xff]
  %v137 = vld [vmem:[%s0 + $0x3f0] sm:$0xff]
  %v138 = vld [vmem:[%s0 + $0x3f8] sm:$0xff]
  %v139 = vld [vmem:[%s0 + $0x400] sm:$0xff]
  %v140 = vld [vmem:[%s0 + $0x408] sm:$0xff]
  %v141 = vld [vmem:[%s0 + $0x410] sm:$0xff]
  %v142 = vld [vmem:[%s0 + $0x418] sm:$0xff]
  %v143 = vld [vmem:[%s0 + $0x420] sm:$0xff]
  %v144 = vld [vmem:[%s0 + $0x428] sm:$0xff]
  %v145 = vld [vmem:[%s0 + $0x430] sm:$0xff]
  %v146 = vld [vmem:[%s0 + $0x438] sm:$0xff]
  %v147 = vld [vmem:[%s0 + $0x440] sm:$0xff]
  %v148 = vld [vmem:[%s0 + $0x448] sm:$0xff]
  %v149 = vld [vmem:[%s0 + $0x450] sm:$0xff]
  %v150 = vld [vmem:[%s0 + $0x458] sm:$0xff]
  %v151 = vld [vmem:[%s0 + $0x460] sm:$0xff]
  %v152 = vld [vmem:[%s0 + $0x468] sm:$0xff]
  %v153 = vld [vmem:[%s0 + $0x470] sm:$0xff]
  %v154 = vld [vmem:[%s0 + $0x478] sm:$0xff]
  %v155 = vld [vmem:[%s0 + $0x480] sm:$0xff]
  %v156 = vld [vmem:[%s0 + $0x488] sm:$0xff]
  %v157 = vld [vmem:[%s0 + $0x490] sm:$0xff]
  %v158 = vld [vmem:[%s0 + $0x498] sm:$0xff]
  %v159 = vld [vmem:[%s0 + $0x4a0] sm:$0xff]
  %v160 = vld [vmem:[%s0 + $0x4a8] sm:$0xff]
  %v161 = vld [vmem:[%s0 + $0x4b0] sm:$0xff]
  %v162 = vld [vmem:[%s0 + $0x4b8] sm:$0xff]
  %v163 = vld [vmem:[%s0 + $0x4c0] sm:$0xff]
  %v164 = vld [vmem:[%s0 + $0x4c8] sm:$0xff]
  %v165 = vld [vmem:[%s0 + $0x4d0] sm:$0xff]
  %v166 = vld [vmem:[%s0 + $0x4d8] sm:$0xff]
  %v167 = vld [vmem:[%s0 + $0x4e0] sm:$0xff]
  %v168 = vld [vmem:[%s0 + $0x4e8] sm:$0xff]
  %v169 = vld [vmem:[%s0 + $0x4f0] sm:$0xff]
  %v170 = vld [vmem:[%s0 + $0x4f8] sm:$0xff]
  %v171 = vld [vmem:[%s0 + $0x500] sm:$0xff]
  %v172 = vld [vmem:[%s0 + $0x508] sm:$0xff]
  %v173 = vld [vmem:[%s0 + $0x510] sm:$0xff]
  %v174 = vld [vmem:[%s0 + $0x518] sm:$0xff]
  %v175 = vld [vmem:[%s0 + $0x520] sm:$0xff]
  %v176 = vld [vmem:[%s0 + $0x528] sm:$0xff]
  %v177 = vld [vmem:[%s0 + $0x530] sm:$0xff]
  %v178 = vld [vmem:[%s0 + $0x538] sm:$0xff]
  %v179 = vld [vmem:[%s0 + $0x540] sm:$0xff]
  %v180 = vld [vmem:[%s0 + $0x548] sm:$0xff]
  %v181 = vld [vmem:[%s0 + $0x550] sm:$0xff]
  %v182 = vld [vmem:[%s0 + $0x558] sm:$0xff]
  %v183 = vld [vmem:[%s0 + $0x560] sm:$0xff]
  %v184 = vld [vmem:[%s0 + $0x568] sm:$0xff]
  %v185 = vld [vmem:[%s0 + $0x570] sm:$0xff]
  %v186 = vld [vmem:[%s0 + $0x578] sm:$0xff]
  %v187 = vld [vmem:[%s0 + $0x580] sm:$0xff]
  %v188 = vld [vmem:[%s0 + $0x588] sm:$0xff]
  %v189 = vld [vmem:[%s0 + $0x590] sm:$0xff]
  %v190 = vld [vmem:[%s0 + $0x598] sm:$0xff]
  %v191 = vld [vmem:[%s0 + $0x5a0] sm:$0xff]
  %v192 = vld [vmem:[%s0 + $0x5a8] sm:$0xff]
  %v193 = vld [vmem:[%s0 + $0x5b0] sm:$0xff]
  %v194 = vld [vmem:[%s0 + $0x5b8] sm:$0xff]
  %v195 = vld [vmem:[%s0 + $0x5c0] sm:$0xff]
  %v196 = vld [vmem:[%s0 + $0x5c8] sm:$0xff]
  %v197 = vld [vmem:[%s0 + $0x5d0] sm:$0xff]
  %v198 = vld [vmem:[%s0 + $0x5d8] sm:$0xff]
  %v199 = vld [vmem:[%s0 + $0x5e0] sm:$0xff]
  %v200 = vld [vmem:[%s0 + $0x5e8] sm:$0xff]
  %v201 = vld [vmem:[%s0 + $0x5f0] sm:$0xff]
  %v202 = vld [vmem:[%s0 + $0x5f8] sm:$0xff]
  %v203 = vld [vmem:[%s0 + $0x600] sm:$0xff]
  %v204 = vld [vmem:[%s0 + $0x608] sm:$0xff]
  %v205 = vld [vmem:[%s0 + $0x610] sm:$0xff]
  %v206 = vld [vmem:[%s0 + $0x618] sm:$0xff]
  %v207 = vld [vmem:[%s0 + $0x620] sm:$0xff]
  %v208 = vld [vmem:[%s0 + $0x628] sm:$0xff]
  %v209 = vld [vmem:[%s0 + $0x630] sm:$0xff]
  %v210 = vld [vmem:[%s0 + $0x638] sm:$0xff]
  %v211 = vld [vmem:[%s0 + $0x640] sm:$0xff]
  %v212 = vld [vmem:[%s0 + $0x648] sm:$0xff]
  %v213 = vld [vmem:[%s0 + $0x650] sm:$0xff]
  %v214 = vld [vmem:[%s0 + $0x658] sm:$0xff]
  %v215 = vld [vmem:[%s0 + $0x660] sm:$0xff]
  %v216 = vld [vmem:[%s0 + $0x668] sm:$0xff]
  %v217 = vld [vmem:[%s0 + $0x670] sm:$0xff]
  %v218 = vld [vmem:[%s0 + $0x678] sm:$0xff]
  %v219 = vld [vmem:[%s0 + $0x680] sm:$0xff]
  %v220 = vld [vmem:[%s0 + $0x688] sm:$0xff]
  %v221 = vld [vmem:[%s0 + $0x690] sm:$0xff]
  %v222 = vld [vmem:[%s0 + $0x698] sm:$0xff]
  %v223 = vld [vmem:[%s0 + $0x6a0] sm:$0xff]
  %v224 = vld [vmem:[%s0 + $0x6a8] sm:$0xff]
  %v225 = vld [vmem:[%s0 + $0x6b0] sm:$0xff]
  %v226 = vld [vmem:[%s0 + $0x6b8] sm:$0xff]
  %v227 = vld [vmem:[%s0 + $0x6c0] sm:$0xff]
  %v228 = vld [vmem:[%s0 + $0x6c8] sm:$0xff]
  %v229 = vld [vmem:[%s0 + $0x6d0] sm:$0xff]
  %v230 = vld [vmem:[%s0 + $0x6d8] sm:$0xff]
  %v231 = vld [vmem:[%s0 + $0x6e0] sm:$0xff]
  %v232 = vld [vmem:[%s0 + $0x6e8] sm:$0xff]
  %v233 = vld [vmem:[%s0 + $0x6f0] sm:$0xff]
  %v234 = vld [vmem:[%s0 + $0x6f8] sm:$0xff]
  %v235 = vld [vmem:[%s0 + $0x700] sm:$0xff]
  %v236 = vld [vmem:[%s0 + $0x708] sm:$0xff]
  %v237 = vld [vmem:[%s0 + $0x710] sm:$0xff]
  %v238 = vld [vmem:[%s0 + $0x718] sm:$0xff]
  %v239 = vld [vmem:[%s0 + $0x720] sm:$0xff]
  %v240 = vld [vmem:[%s0 + $0x728] sm:$0xff]
  %v241 = vld [vmem:[%s0 + $0x730] sm:$0xff]
  %v242 = vld [vmem:[%s0 + $0x738] sm:$0xff]
  %v243 = vld [vmem:[%s0 + $0x740] sm:$0xff]
  %v244 = vld [vmem:[%s0 + $0x748] sm:$0xff]
  %v245 = vld [vmem:[%s0 + $0x750] sm:$0xff]
  %v246 = vld [vmem:[%s0 + $0x758] sm:$0xff]
  %v247 = vld [vmem:[%s0 + $0x760] sm:$0xff]
  %v248 = vld [vmem:[%s0 + $0x768] sm:$0xff]
  %v249 = vld [vmem:[%s0 + $0x770] sm:$0xff]
  %v250 = vld [vmem:[%s0 + $0x778] sm:$0xff]
  %v251 = vld [vmem:[%s0 + $0x780] sm:$0xff]
  %v252 = vld [vmem:[%s0 + $0x788] sm:$0xff]
  %v253 = vld [vmem:[%s0 + $0x790] sm:$0xff]
  %v254 = vld [vmem:[%s0 + $0x798] sm:$0xff]
  %v255 = vld [vmem:[%s0 + $0x7a0] sm:$0xff]
  %v256 = vld [vmem:[%s0 + $0x7a8] sm:$0xff]
  %v257 = vld [vmem:[%s0 + $0x7b0] sm:$0xff]
  %v258 = vld [vmem:[%s0 + $0x7b8] sm:$0xff]
  %v259 = vld [vmem:[%s0 + $0x7c0] sm:$0xff]
  %v260 = vld [vmem:[%s0 + $0x7c8] sm:$0xff]
  %v261 = vld [vmem:[%s0 + $0x7d0] sm:$0xff]
  %v262 = vld [vmem:[%s0 + $0x7d8] sm:$0xff]
  %v263 = vld [vmem:[%s0 + $0x7e0] sm:$0xff]
  %v264 = vld [vmem:[%s0 + $0x7e8] sm:$0xff]
  %v265 = vld [vmem:[%s0 + $0x7f0] sm:$0xff]
  %v266 = vld [vmem:[%s0 + $0x7f8] sm:$0xff]
  %v267 = vld [vmem:[%s0 + $0x800] sm:$0xff]
  %v268 = vld [vmem:[%s0 + $0x808] sm:$0xff]
  %v269 = vld [vmem:[%s0 + $0x810] sm:$0xff]
  %v270 = vld [vmem:[%s0 + $0x818] sm:$0xff]
  %v271 = vld [vmem:[%s0 + $0x820] sm:$0xff]
  %v272 = vld [vmem:[%s0 + $0x828] sm:$0xff]
  %v273 = vld [vmem:[%s0 + $0x830] sm:$0xff]
  %v274 = vld [vmem:[%s0 + $0x838] sm:$0xff]
  %v275 = vld [vmem:[%s0 + $0x840] sm:$0xff]
  %v276 = vld [vmem:[%s0 + $0x848] sm:$0xff]
  %v277 = vld [vmem:[%s0 + $0x850] sm:$0xff]
  %v278 = vld [vmem:[%s0 + $0x858] sm:$0xff]
  %v279 = vld [vmem:[%s0 + $0x860] sm:$0xff]
  %v280 = vld [vmem:[%s0 + $0x868] sm:$0xff]
  %v281 = vld [vmem:[%s0 + $0x870] sm:$0xff]
  %v282 = vld [vmem:[%s0 + $0x878] sm:$0xff]
  %v283 = vld [vmem:[%s0 + $0x880] sm:$0xff]
  %v284 = vld [vmem:[%s0 + $0x888] sm:$0xff]
  %v285 = vld [vmem:[%s0 + $0x890] sm:$0xff]
  %v286 = vld [vmem:[%s0 + $0x898] sm:$0xff]
  %v287 = vld [vmem:[%s0 + $0x8a0] sm:$0xff]
  %v288 = vld [vmem:[%s0 + $0x8a8] sm:$0xff]
  %v289 = vld [vmem:[%s0 + $0x8b0] sm:$0xff]
  %v290 = vld [vmem:[%s0 + $0x8b8] sm:$0xff]
  %v291 = vld [vmem:[%s0 + $0x8c0] sm:$0xff]
  %v292 = vld [vmem:[%s0 + $0x8c8] sm:$0xff]
  %v293 = vld [vmem:[%s0 + $0x8d0] sm:$0xff]
  %v294 = vld [vmem:[%s0 + $0x8d8] sm:$0xff]
  %v295 = vld [vmem:[%s0 + $0x8e0] sm:$0xff]
  %v296 = vld [vmem:[%s0 + $0x8e8] sm:$0xff]
  %v297 = vld [vmem:[%s0 + $0x8f0] sm:$0xff]
  %v298 = vld [vmem:[%s0 + $0x8f8] sm:$0xff]
  %v299 = vld [vmem:[%s0 + $0x900] sm:$0xff]
  %v300 = vld [vmem:[%s0 + $0x908] sm:$0xff]
  %v301 = vld [vmem:[%s0 + $0x910] sm:$0xff]
  %v302 = vld [vmem:[%s0 + $0x918] sm:$0xff]
  %v303 = vld [vmem:[%s0 + $0x920] sm:$0xff]
  %v304 = vld [vmem:[%s0 + $0x928] sm:$0xff]
  %v305 = vld [vmem:[%s0 + $0x930] sm:$0xff]
  %v306 = vld [vmem:[%s0 + $0x938] sm:$0xff]
  %v307 = vld [vmem:[%s0 + $0x940] sm:$0xff]
  %v308 = vld [vmem:[%s0 + $0x948] sm:$0xff]
  %v309 = vld [vmem:[%s0 + $0x950] sm:$0xff]
  %v310 = vld [vmem:[%s0 + $0x958] sm:$0xff]
  %v311 = vld [vmem:[%s0 + $0x960] sm:$0xff]
  %v312 = vld [vmem:[%s0 + $0x968] sm:$0xff]
  %v313 = vld [vmem:[%s0 + $0x970] sm:$0xff]
  %v314 = vld [vmem:[%s0 + $0x978] sm:$0xff]
  %v315 = vld [vmem:[%s0 + $0x980] sm:$0xff]
  %v316 = vld [vmem:[%s0 + $0x988] sm:$0xff]
  %v317 = vld [vmem:[%s0 + $0x990] sm:$0xff]
  %v318 = vld [vmem:[%s0 + $0x998] sm:$0xff]
  %v319 = vld [vmem:[%s0 + $0x9a0] sm:$0xff]
  %v320 = vld [vmem:[%s0 + $0x9a8] sm:$0xff]
  %v321 = vld [vmem:[%s0 + $0x9b0] sm:$0xff]
  %v322 = vld [vmem:[%s0 + $0x9b8] sm:$0xff]
  %v323 = vld [vmem:[%s0 + $0x9c0] sm:$0xff]
  %v324 = vld [vmem:[%s0 + $0x9c8] sm:$0xff]
  %v325 = vld [vmem:[%s0 + $0x9d0] sm:$0xff]
  %v326 = vld [vmem:[%s0 + $0x9d8] sm:$0xff]
  %v327 = vld [vmem:[%s0 + $0x9e0] sm:$0xff]
  %v328 = vld [vmem:[%s0 + $0x9e8] sm:$0xff]
  %v329 = vld [vmem:[%s0 + $0x9f0] sm:$0xff]
  %v330 = vld [vmem:[%s0 + $0x9f8] sm:$0xff]
  %v331 = vld [vmem:[%s0 + $0xa00] sm:$0xff]
  %v332 = vld [vmem:[%s0 + $0xa08] sm:$0xff]
  %v333 = vld [vmem:[%s0 + $0xa10] sm:$0xff]
  %v334 = vld [vmem:[%s0 + $0xa18] sm:$0xff]
  %v335 = vld [vmem:[%s0 + $0xa20] sm:$0xff]
  %v336 = vld [vmem:[%s0 + $0xa28] sm:$0xff]
  %v337 = vld [vmem:[%s0 + $0xa30] sm:$0xff]
  %v338 = vld [vmem:[%s0 + $0xa38] sm:$0xff]
  %v339 = vld [vmem:[%s0 + $0xa40] sm:$0xff]
  %v340 = vld [vmem:[%s0 + $0xa48] sm:$0xff]
  %v341 = vld [vmem:[%s0 + $0xa50] sm:$0xff]
  %v342 = vld [vmem:[%s0 + $0xa58] sm:$0xff]
  %v343 = vld [vmem:[%s0 + $0xa60] sm:$0xff]
  %v344 = vld [vmem:[%s0 + $0xa68] sm:$0xff]
  %v345 = vld [vmem:[%s0 + $0xa70] sm:$0xff]
  %v346 = vld [vmem:[%s0 + $0xa78] sm:$0xff]
  %v347 = vld [vmem:[%s0 + $0xa80] sm:$0xff]
  %v348 = vld [vmem:[%s0 + $0xa88] sm:$0xff]
  %v349 = vld [vmem:[%s0 + $0xa90] sm:$0xff]
  %v350 = vld [vmem:[%s0 + $0xa98] sm:$0xff]
  %v351 = vld [vmem:[%s0 + $0xaa0] sm:$0xff]
  %v352 = vld [vmem:[%s0 + $0xaa8] sm:$0xff]
  %v353 = vld [vmem:[%s0 + $0xab0] sm:$0xff]
  %v354 = vld [vmem:[%s0 + $0xab8] sm:$0xff]
  %v355 = vld [vmem:[%s0 + $0xac0] sm:$0xff]
  %v356 = vld [vmem:[%s0 + $0xac8] sm:$0xff]
  %v357 = vld [vmem:[%s0 + $0xad0] sm:$0xff]
  %v358 = vld [vmem:[%s0 + $0xad8] sm:$0xff]
  %v359 = vld [vmem:[%s0 + $0xae0] sm:$0xff]
  %v360 = vld [vmem:[%s0 + $0xae8] sm:$0xff]
  %v361 = vld [vmem:[%s0 + $0xaf0] sm:$0xff]
  %v362 = vld [vmem:[%s0 + $0xaf8] sm:$0xff]
  %v363 = vld [vmem:[%s0 + $0xb00] sm:$0xff]
  %v364 = vld [vmem:[%s0 + $0xb08] sm:$0xff]
  %v365 = vld [vmem:[%s0 + $0xb10] sm:$0xff]
  %v366 = vld [vmem:[%s0 + $0xb18] sm:$0xff]
  %v367 = vld [vmem:[%s0 + $0xb20] sm:$0xff]
  %v368 = vld [vmem:[%s0 + $0xb28] sm:$0xff]
  %v369 = vld [vmem:[%s0 + $0xb30] sm:$0xff]
  %v370 = vld [vmem:[%s0 + $0xb38] sm:$0xff]
  %v371 = vld [vmem:[%s0 + $0xb40] sm:$0xff]
  %v372 = vld [vmem:[%s0 + $0xb48] sm:$0xff]
  %v373 = vld [vmem:[%s0 + $0xb50] sm:$0xff]
  %v374 = vld [vmem:[%s0 + $0xb58] sm:$0xff]
  %v375 = vld [vmem:[%s0 + $0xb60] sm:$0xff]
  %v376 = vld [vmem:[%s0 + $0xb68] sm:$0xff]
  %v377 = vld [vmem:[%s0 + $0xb70] sm:$0xff]
  %v378 = vld [vmem:[%s0 + $0xb78] sm:$0xff]
  %v379 = vld [vmem:[%s0 + $0xb80] sm:$0xff]
  %v380 = vld [vmem:[%s0 + $0xb88] sm:$0xff]
  %v381 = vld [vmem:[%s0 + $0xb90] sm:$0xff]
  %v382 = vld [vmem:[%s0 + $0xb98] sm:$0xff]
  %v383 = vld [vmem:[%s0 + $0xba0] sm:$0xff]
  %v384 = vld [vmem:[%s0 + $0xba8] sm:$0xff]
  %v385 = vld [vmem:[%s0 + $0xbb0] sm:$0xff]
  %v386 = vld [vmem:[%s0 + $0xbb8] sm:$0xff]
  %v387 = vld [vmem:[%s0 + $0xbc0] sm:$0xff]
  %v388 = vld [vmem:[%s0 + $0xbc8] sm:$0xff]
  %v389 = vld [vmem:[%s0 + $0xbd0] sm:$0xff]
  %v390 = vld [vmem:[%s0 + $0xbd8] sm:$0xff]
  %v391 = vld [vmem:[%s0 + $0xbe0] sm:$0xff]
  %v392 = vld [vmem:[%s0 + $0xbe8] sm:$0xff]
  %v393 = vld [vmem:[%s0 + $0xbf0] sm:$0xff]
  %v394 = vld [vmem:[%s0 + $0xbf8] sm:$0xff]
  %v395 = vld [vmem:[%s0 + $0xc00] sm:$0xff]
  %v396 = vld [vmem:[%s0 + $0xc08] sm:$0xff]
  %v397 = vld [vmem:[%s0 + $0xc10] sm:$0xff]
  %v398 = vld [vmem:[%s0 + $0xc18] sm:$0xff]
  %v399 = vld [vmem:[%s0 + $0xc20] sm:$0xff]
  %v400 = vld [vmem:[%s0 + $0xc28] sm:$0xff]
  %v401 = vld [vmem:[%s0 + $0xc30] sm:$0xff]
  %v402 = vld [vmem:[%s0 + $0xc38] sm:$0xff]
  %v403 = vld [vmem:[%s0 + $0xc40] sm:$0xff]
  %v404 = vld [vmem:[%s0 + $0xc48] sm:$0xff]
  %v405 = vld [vmem:[%s0 + $0xc50] sm:$0xff]
  %v406 = vld [vmem:[%s0 + $0xc58] sm:$0xff]
  %v407 = vld [vmem:[%s0 + $0xc60] sm:$0xff]
  %v408 = vld [vmem:[%s0 + $0xc68] sm:$0xff]
  %v409 = vld [vmem:[%s0 + $0xc70] sm:$0xff]
  %v410 = vld [vmem:[%s0 + $0xc78] sm:$0xff]
  %v411 = vld [vmem:[%s0 + $0xc80] sm:$0xff]
  %v412 = vld [vmem:[%s0 + $0xc88] sm:$0xff]
  %v413 = vld [vmem:[%s0 + $0xc90] sm:$0xff]
  %v414 = vld [vmem:[%s0 + $0xc98] sm:$0xff]
  %v415 = vld [vmem:[%s0 + $0xca0] sm:$0xff]
  %v416 = vld [vmem:[%s0 + $0xca8] sm:$0xff]
  %v417 = vld [vmem:[%s0 + $0xcb0] sm:$0xff]
  %v418 = vld [vmem:[%s0 + $0xcb8] sm:$0xff]
  %v419 = vmax.f32 %v11, 0.0
  %v420 = vmax.f32 %v12, 0.0
  %v421 = vmax.f32 %v13, 0.0
  %v422 = vmax.f32 %v14, 0.0
  %v423 = vmax.f32 %v15, 0.0
  %v424 = vmax.f32 %v16, 0.0
  %v425 = vmax.f32 %v17, 0.0
  %v426 = vmax.f32 %v18, 0.0
  %v427 = vmax.f32 %v19, 0.0
  %v428 = vmax.f32 %v20, 0.0
  %v429 = vmax.f32 %v21, 0.0
  %v430 = vmax.f32 %v22, 0.0
  %v431 = vmax.f32 %v23, 0.0
  %v432 = vmax.f32 %v24, 0.0
  %v433 = vmax.f32 %v25, 0.0
  %v434 = vmax.f32 %v26, 0.0
  %v435 = vmax.f32 %v27, 0.0
  %v436 = vmax.f32 %v28, 0.0
  %v437 = vmax.f32 %v29, 0.0
  %v438 = vmax.f32 %v30, 0.0
  %v439 = vmax.f32 %v31, 0.0
  %v440 = vmax.f32 %v32, 0.0
  %v441 = vmax.f32 %v33, 0.0
  %v442 = vmax.f32 %v34, 0.0
  %v443 = vmax.f32 %v35, 0.0
  %v444 = vmax.f32 %v36, 0.0
  %v445 = vmax.f32 %v37, 0.0
  %v446 = vmax.f32 %v38, 0.0
  %v447 = vmax.f32 %v39, 0.0
  %v448 = vmax.f32 %v40, 0.0
  %v449 = vmax.f32 %v41, 0.0
  %v450 = vmax.f32 %v42, 0.0
  %v451 = vmax.f32 %v43, 0.0
  %v452 = vmax.f32 %v44, 0.0
  %v453 = vmax.f32 %v45, 0.0
  %v454 = vmax.f32 %v46, 0.0
  %v455 = vmax.f32 %v47, 0.0
  %v456 = vmax.f32 %v48, 0.0
  %v457 = vmax.f32 %v49, 0.0
  %v458 = vmax.f32 %v50, 0.0
  %v459 = vmax.f32 %v51, 0.0
  %v460 = vmax.f32 %v52, 0.0
  %v461 = vmax.f32 %v53, 0.0
  %v462 = vmax.f32 %v54, 0.0
  %v463 = vmax.f32 %v55, 0.0
  %v464 = vmax.f32 %v56, 0.0
  %v465 = vmax.f32 %v57, 0.0
  %v466 = vmax.f32 %v58, 0.0
  %v467 = vmax.f32 %v59, 0.0
  %v468 = vmax.f32 %v60, 0.0
  %v469 = vmax.f32 %v61, 0.0
  %v470 = vmax.f32 %v62, 0.0
  %v471 = vmax.f32 %v63, 0.0
  %v472 = vmax.f32 %v64, 0.0
  %v473 = vmax.f32 %v65, 0.0
  %v474 = vmax.f32 %v66, 0.0
  %v475 = vmax.f32 %v67, 0.0
  %v476 = vmax.f32 %v68, 0.0
  %v477 = vmax.f32 %v69, 0.0
  %v478 = vmax.f32 %v70, 0.0
  %v479 = vmax.f32 %v71, 0.0
  %v480 = vmax.f32 %v72, 0.0
  %v481 = vmax.f32 %v73, 0.0
  %v482 = vmax.f32 %v74, 0.0
  %v483 = vmax.f32 %v75, 0.0
  %v484 = vmax.f32 %v76, 0.0
  %v485 = vmax.f32 %v77, 0.0
  %v486 = vmax.f32 %v78, 0.0
  %v487 = vmax.f32 %v79, 0.0
  %v488 = vmax.f32 %v80, 0.0
  %v489 = vmax.f32 %v81, 0.0
  %v490 = vmax.f32 %v82, 0.0
  %v491 = vmax.f32 %v83, 0.0
  %v492 = vmax.f32 %v84, 0.0
  %v493 = vmax.f32 %v85, 0.0
  %v494 = vmax.f32 %v86, 0.0
  %v495 = vmax.f32 %v87, 0.0
  %v496 = vmax.f32 %v88, 0.0
  %v497 = vmax.f32 %v89, 0.0
  %v498 = vmax.f32 %v90, 0.0
  %v499 = vmax.f32 %v91, 0.0
  %v500 = vmax.f32 %v92, 0.0
  %v501 = vmax.f32 %v93, 0.0
  %v502 = vmax.f32 %v94, 0.0
  %v503 = vmax.f32 %v95, 0.0
  %v504 = vmax.f32 %v96, 0.0
  %v505 = vmax.f32 %v97, 0.0
  %v506 = vmax.f32 %v98, 0.0
  %v507 = vmax.f32 %v99, 0.0
  %v508 = vmax.f32 %v100, 0.0
  %v509 = vmax.f32 %v101, 0.0
  %v510 = vmax.f32 %v102, 0.0
  %v511 = vmax.f32 %v103, 0.0
  %v512 = vmax.f32 %v104, 0.0
  %v513 = vmax.f32 %v105, 0.0
  %v514 = vmax.f32 %v106, 0.0
  %v515 = vmax.f32 %v107, 0.0
  %v516 = vmax.f32 %v108, 0.0
  %v517 = vmax.f32 %v109, 0.0
  %v518 = vmax.f32 %v110, 0.0
  %v519 = vmax.f32 %v111, 0.0
  %v520 = vmax.f32 %v112, 0.0
  %v521 = vmax.f32 %v113, 0.0
  %v522 = vmax.f32 %v114, 0.0
  %v523 = vmax.f32 %v115, 0.0
  %v524 = vmax.f32 %v116, 0.0
  %v525 = vmax.f32 %v117, 0.0
  %v526 = vmax.f32 %v118, 0.0
  %v527 = vmax.f32 %v119, 0.0
  %v528 = vmax.f32 %v120, 0.0
  %v529 = vmax.f32 %v121, 0.0
  %v530 = vmax.f32 %v122, 0.0
  %v531 = vmax.f32 %v123, 0.0
  %v532 = vmax.f32 %v124, 0.0
  %v533 = vmax.f32 %v125, 0.0
  %v534 = vmax.f32 %v126, 0.0
  %v535 = vmax.f32 %v127, 0.0
  %v536 = vmax.f32 %v128, 0.0
  %v537 = vmax.f32 %v129, 0.0
  %v538 = vmax.f32 %v130, 0.0
  %v539 = vmax.f32 %v131, 0.0
  %v540 = vmax.f32 %v132, 0.0
  %v541 = vmax.f32 %v133, 0.0
  %v542 = vmax.f32 %v134, 0.0
  %v543 = vmax.f32 %v135, 0.0
  %v544 = vmax.f32 %v136, 0.0
  %v545 = vmax.f32 %v137, 0.0
  %v546 = vmax.f32 %v138, 0.0
  %v547 = vmax.f32 %v139, 0.0
  %v548 = vmax.f32 %v140, 0.0
  %v549 = vmax.f32 %v141, 0.0
  %v550 = vmax.f32 %v142, 0.0
  %v551 = vmax.f32 %v143, 0.0
  %v552 = vmax.f32 %v144, 0.0
  %v553 = vmax.f32 %v145, 0.0
  %v554 = vmax.f32 %v146, 0.0
  %v555 = vmax.f32 %v147, 0.0
  %v556 = vmax.f32 %v148, 0.0
  %v557 = vmax.f32 %v149, 0.0
  %v558 = vmax.f32 %v150, 0.0
  %v559 = vmax.f32 %v151, 0.0
  %v560 = vmax.f32 %v152, 0.0
  %v561 = vmax.f32 %v153, 0.0
  %v562 = vmax.f32 %v154, 0.0
  %v563 = vmax.f32 %v155, 0.0
  %v564 = vmax.f32 %v156, 0.0
  %v565 = vmax.f32 %v157, 0.0
  %v566 = vmax.f32 %v158, 0.0
  %v567 = vmax.f32 %v159, 0.0
  %v568 = vmax.f32 %v160, 0.0
  %v569 = vmax.f32 %v161, 0.0
  %v570 = vmax.f32 %v162, 0.0
  %v571 = vmax.f32 %v163, 0.0
  %v572 = vmax.f32 %v164, 0.0
  %v573 = vmax.f32 %v165, 0.0
  %v574 = vmax.f32 %v166, 0.0
  %v575 = vmax.f32 %v167, 0.0
  %v576 = vmax.f32 %v168, 0.0
  %v577 = vmax.f32 %v169, 0.0
  %v578 = vmax.f32 %v170, 0.0
  %v579 = vmax.f32 %v171, 0.0
  %v580 = vmax.f32 %v172, 0.0
  %v581 = vmax.f32 %v173, 0.0
  %v582 = vmax.f32 %v174, 0.0
  %v583 = vmax.f32 %v175, 0.0
  %v584 = vmax.f32 %v176, 0.0
  %v585 = vmax.f32 %v177, 0.0
  %v586 = vmax.f32 %v178, 0.0
  %v587 = vmax.f32 %v179, 0.0
  %v588 = vmax.f32 %v180, 0.0
  %v589 = vmax.f32 %v181, 0.0
  %v590 = vmax.f32 %v182, 0.0
  %v591 = vmax.f32 %v183, 0.0
  %v592 = vmax.f32 %v184, 0.0
  %v593 = vmax.f32 %v185, 0.0
  %v594 = vmax.f32 %v186, 0.0
  %v595 = vmax.f32 %v187, 0.0
  %v596 = vmax.f32 %v188, 0.0
  %v597 = vmax.f32 %v189, 0.0
  %v598 = vmax.f32 %v190, 0.0
  %v599 = vmax.f32 %v191, 0.0
  %v600 = vmax.f32 %v192, 0.0
  %v601 = vmax.f32 %v193, 0.0
  %v602 = vmax.f32 %v194, 0.0
  %v603 = vmax.f32 %v195, 0.0
  %v604 = vmax.f32 %v196, 0.0
  %v605 = vmax.f32 %v197, 0.0
  %v606 = vmax.f32 %v198, 0.0
  %v607 = vmax.f32 %v199, 0.0
  %v608 = vmax.f32 %v200, 0.0
  %v609 = vmax.f32 %v201, 0.0
  %v610 = vmax.f32 %v202, 0.0
  %v611 = vmax.f32 %v203, 0.0
  %v612 = vmax.f32 %v204, 0.0
  %v613 = vmax.f32 %v205, 0.0
  %v614 = vmax.f32 %v206, 0.0
  %v615 = vmax.f32 %v207, 0.0
  %v616 = vmax.f32 %v208, 0.0
  %v617 = vmax.f32 %v209, 0.0
  %v618 = vmax.f32 %v210, 0.0
  %v619 = vmax.f32 %v211, 0.0
  %v620 = vmax.f32 %v212, 0.0
  %v621 = vmax.f32 %v213, 0.0
  %v622 = vmax.f32 %v214, 0.0
  %v623 = vmax.f32 %v215, 0.0
  %v624 = vmax.f32 %v216, 0.0
  %v625 = vmax.f32 %v217, 0.0
  %v626 = vmax.f32 %v218, 0.0
  %v627 = vmax.f32 %v219, 0.0
  %v628 = vmax.f32 %v220, 0.0
  %v629 = vmax.f32 %v221, 0.0
  %v630 = vmax.f32 %v222, 0.0
  %v631 = vmax.f32 %v223, 0.0
  %v632 = vmax.f32 %v224, 0.0
  %v633 = vmax.f32 %v225, 0.0
  %v634 = vmax.f32 %v226, 0.0
  %v635 = vmax.f32 %v227, 0.0
  %v636 = vmax.f32 %v228, 0.0
  %v637 = vmax.f32 %v229, 0.0
  %v638 = vmax.f32 %v230, 0.0
  %v639 = vmax.f32 %v231, 0.0
  %v640 = vmax.f32 %v232, 0.0
  %v641 = vmax.f32 %v233, 0.0
  %v642 = vmax.f32 %v234, 0.0
  %v643 = vmax.f32 %v235, 0.0
  %v644 = vmax.f32 %v236, 0.0
  %v645 = vmax.f32 %v237, 0.0
  %v646 = vmax.f32 %v238, 0.0
  %v647 = vmax.f32 %v239, 0.0
  %v648 = vmax.f32 %v240, 0.0
  %v649 = vmax.f32 %v241, 0.0
  %v650 = vmax.f32 %v242, 0.0
  %v651 = vmax.f32 %v243, 0.0
  %v652 = vmax.f32 %v244, 0.0
  %v653 = vmax.f32 %v245, 0.0
  %v654 = vmax.f32 %v246, 0.0
  %v655 = vmax.f32 %v247, 0.0
  %v656 = vmax.f32 %v248, 0.0
  %v657 = vmax.f32 %v249, 0.0
  %v658 = vmax.f32 %v250, 0.0
  %v659 = vmax.f32 %v251, 0.0
  %v660 = vmax.f32 %v252, 0.0
  %v661 = vmax.f32 %v253, 0.0
  %v662 = vmax.f32 %v254, 0.0
  %v663 = vmax.f32 %v255, 0.0
  %v664 = vmax.f32 %v256, 0.0
  %v665 = vmax.f32 %v257, 0.0
  %v666 = vmax.f32 %v258, 0.0
  %v667 = vmax.f32 %v259, 0.0
  %v668 = vmax.f32 %v260, 0.0
  %v669 = vmax.f32 %v261, 0.0
  %v670 = vmax.f32 %v262, 0.0
  %v671 = vmax.f32 %v263, 0.0
  %v672 = vmax.f32 %v264, 0.0
  %v673 = vmax.f32 %v265, 0.0
  %v674 = vmax.f32 %v266, 0.0
  %v675 = vmax.f32 %v267, 0.0
  %v676 = vmax.f32 %v268, 0.0
  %v677 = vmax.f32 %v269, 0.0
  %v678 = vmax.f32 %v270, 0.0
  %v679 = vmax.f32 %v271, 0.0
  %v680 = vmax.f32 %v272, 0.0
  %v681 = vmax.f32 %v273, 0.0
  %v682 = vmax.f32 %v274, 0.0
  %v683 = vmax.f32 %v275, 0.0
  %v684 = vmax.f32 %v276, 0.0
  %v685 = vmax.f32 %v277, 0.0
  %v686 = vmax.f32 %v278, 0.0
  %v687 = vmax.f32 %v279, 0.0
  %v688 = vmax.f32 %v280, 0.0
  %v689 = vmax.f32 %v281, 0.0
  %v690 = vmax.f32 %v282, 0.0
  %v691 = vmax.f32 %v283, 0.0
  %v692 = vmax.f32 %v284, 0.0
  %v693 = vmax.f32 %v285, 0.0
  %v694 = vmax.f32 %v286, 0.0
  %v695 = vmax.f32 %v287, 0.0
  %v696 = vmax.f32 %v288, 0.0
  %v697 = vmax.f32 %v289, 0.0
  %v698 = vmax.f32 %v290, 0.0
  %v699 = vmax.f32 %v291, 0.0
  %v700 = vmax.f32 %v292, 0.0
  %v701 = vmax.f32 %v293, 0.0
  %v702 = vmax.f32 %v294, 0.0
  %v703 = vmax.f32 %v295, 0.0
  %v704 = vmax.f32 %v296, 0.0
  %v705 = vmax.f32 %v297, 0.0
  %v706 = vmax.f32 %v298, 0.0
  %v707 = vmax.f32 %v299, 0.0
  %v708 = vmax.f32 %v300, 0.0
  %v709 = vmax.f32 %v301, 0.0
  %v710 = vmax.f32 %v302, 0.0
  %v711 = vmax.f32 %v303, 0.0
  %v712 = vmax.f32 %v304, 0.0
  %v713 = vmax.f32 %v305, 0.0
  %v714 = vmax.f32 %v306, 0.0
  %v715 = vmax.f32 %v307, 0.0
  %v716 = vmax.f32 %v308, 0.0
  %v717 = vmax.f32 %v309, 0.0
  %v718 = vmax.f32 %v310, 0.0
  %v719 = vmax.f32 %v311, 0.0
  %v720 = vmax.f32 %v312, 0.0
  %v721 = vmax.f32 %v313, 0.0
  %v722 = vmax.f32 %v314, 0.0
  %v723 = vmax.f32 %v315, 0.0
  %v724 = vmax.f32 %v316, 0.0
  %v725 = vmax.f32 %v317, 0.0
  %v726 = vmax.f32 %v318, 0.0
  %v727 = vmax.f32 %v319, 0.0
  %v728 = vmax.f32 %v320, 0.0
  %v729 = vmax.f32 %v321, 0.0
  %v730 = vmax.f32 %v322, 0.0
  %v731 = vmax.f32 %v323, 0.0
  %v732 = vmax.f32 %v324, 0.0
  %v733 = vmax.f32 %v325, 0.0
  %v734 = vmax.f32 %v326, 0.0
  %v735 = vmax.f32 %v327, 0.0
  %v736 = vmax.f32 %v328, 0.0
  %v737 = vmax.f32 %v329, 0.0
  %v738 = vmax.f32 %v330, 0.0
  %v739 = vmax.f32 %v331, 0.0
  %v740 = vmax.f32 %v332, 0.0
  %v741 = vmax.f32 %v333, 0.0
  %v742 = vmax.f32 %v334, 0.0
  %v743 = vmax.f32 %v335, 0.0
  %v744 = vmax.f32 %v336, 0.0
  %v745 = vmax.f32 %v337, 0.0
  %v746 = vmax.f32 %v338, 0.0
  %v747 = vmax.f32 %v339, 0.0
  %v748 = vmax.f32 %v340, 0.0
  %v749 = vmax.f32 %v341, 0.0
  %v750 = vmax.f32 %v342, 0.0
  %v751 = vmax.f32 %v343, 0.0
  %v752 = vmax.f32 %v344, 0.0
  %v753 = vmax.f32 %v345, 0.0
  %v754 = vmax.f32 %v346, 0.0
  %v755 = vmax.f32 %v347, 0.0
  %v756 = vmax.f32 %v348, 0.0
  %v757 = vmax.f32 %v349, 0.0
  %v758 = vmax.f32 %v350, 0.0
  %v759 = vmax.f32 %v351, 0.0
  %v760 = vmax.f32 %v352, 0.0
  %v761 = vmax.f32 %v353, 0.0
  %v762 = vmax.f32 %v354, 0.0
  %v763 = vmax.f32 %v355, 0.0
  %v764 = vmax.f32 %v356, 0.0
  %v765 = vmax.f32 %v357, 0.0
  %v766 = vmax.f32 %v358, 0.0
  %v767 = vmax.f32 %v359, 0.0
  %v768 = vmax.f32 %v360, 0.0
  %v769 = vmax.f32 %v361, 0.0
  %v770 = vmax.f32 %v362, 0.0
  %v771 = vmax.f32 %v363, 0.0
  %v772 = vmax.f32 %v364, 0.0
  %v773 = vmax.f32 %v365, 0.0
  %v774 = vmax.f32 %v366, 0.0
  %v775 = vmax.f32 %v367, 0.0
  %v776 = vmax.f32 %v368, 0.0
  %v777 = vmax.f32 %v369, 0.0
  %v778 = vmax.f32 %v370, 0.0
  %v779 = vmax.f32 %v371, 0.0
  %v780 = vmax.f32 %v372, 0.0
  %v781 = vmax.f32 %v373, 0.0
  %v782 = vmax.f32 %v374, 0.0
  %v783 = vmax.f32 %v375, 0.0
  %v784 = vmax.f32 %v376, 0.0
  %v785 = vmax.f32 %v377, 0.0
  %v786 = vmax.f32 %v378, 0.0
  %v787 = vmax.f32 %v379, 0.0
  %v788 = vmax.f32 %v380, 0.0
  %v789 = vmax.f32 %v381, 0.0
  %v790 = vmax.f32 %v382, 0.0
  %v791 = vmax.f32 %v383, 0.0
  %v792 = vmax.f32 %v384, 0.0
  %v793 = vmax.f32 %v385, 0.0
  %v794 = vmax.f32 %v386, 0.0
  %v795 = vmax.f32 %v387, 0.0
  %v796 = vmax.f32 %v388, 0.0
  %v797 = vmax.f32 %v389, 0.0
  %v798 = vmax.f32 %v390, 0.0
  %v799 = vmax.f32 %v391, 0.0
  %v800 = vmax.f32 %v392, 0.0
  %v801 = vmax.f32 %v393, 0.0
  %v802 = vmax.f32 %v394, 0.0
  %v803 = vmax.f32 %v395, 0.0
  %v804 = vmax.f32 %v396, 0.0
  %v805 = vmax.f32 %v397, 0.0
  %v806 = vmax.f32 %v398, 0.0
  %v807 = vmax.f32 %v399, 0.0
  %v808 = vmax.f32 %v400, 0.0
  %v809 = vmax.f32 %v401, 0.0
  %v810 = vmax.f32 %v402, 0.0
  %v811 = vmax.f32 %v403, 0.0
  %v812 = vmax.f32 %v404, 0.0
  %v813 = vmax.f32 %v405, 0.0
  %v814 = vmax.f32 %v406, 0.0
  %v815 = vmax.f32 %v407, 0.0
  %v816 = vmax.f32 %v408, 0.0
  %v817 = vmax.f32 %v409, 0.0
  %v818 = vmax.f32 %v410, 0.0
  %v819 = vmax.f32 %v411, 0.0
  %v820 = vmax.f32 %v412, 0.0
  %v821 = vmax.f32 %v413, 0.0
  %v822 = vmax.f32 %v414, 0.0
  %v823 = vmax.f32 %v415, 0.0
  %v824 = vmax.f32 %v416, 0.0
  %v825 = vmax.f32 %v417, 0.0
  %v826 = vmax.f32 %v418, 0.0
  %v827 = vld [vmem:[%s1] sm:$0xff]
  %v828 = vld [vmem:[%s1 + $0x8] sm:$0xff]
  %v829 = vld [vmem:[%s1 + $0x10] sm:$0xff]
  %v830 = vld [vmem:[%s1 + $0x18] sm:$0xff]
  %v831 = vld [vmem:[%s1 + $0x20] sm:$0xff]
  %v832 = vld [vmem:[%s1 + $0x28] sm:$0xff]
  %v833 = vld [vmem:[%s1 + $0x30] sm:$0xff]
  %v834 = vld [vmem:[%s1 + $0x38] sm:$0xff]
  %v835 = vld [vmem:[%s1 + $0x40] sm:$0xff]
  %v836 = vld [vmem:[%s1 + $0x48] sm:$0xff]
  %v837 = vld [vmem:[%s1 + $0x50] sm:$0xff]
  %v838 = vld [vmem:[%s1 + $0x58] sm:$0xff]
  %v839 = vld [vmem:[%s1 + $0x60] sm:$0xff]
  %v840 = vld [vmem:[%s1 + $0x68] sm:$0xff]
  %v841 = vld [vmem:[%s1 + $0x70] sm:$0xff]
  %v842 = vld [vmem:[%s1 + $0x78] sm:$0xff]
  %v843 = vld [vmem:[%s1 + $0x80] sm:$0xff]
  %v844 = vld [vmem:[%s1 + $0x88] sm:$0xff]
  %v845 = vld [vmem:[%s1 + $0x90] sm:$0xff]
  %v846 = vld [vmem:[%s1 + $0x98] sm:$0xff]
  %v847 = vld [vmem:[%s1 + $0xa0] sm:$0xff]
  %v848 = vld [vmem:[%s1 + $0xa8] sm:$0xff]
  %v849 = vld [vmem:[%s1 + $0xb0] sm:$0xff]
  %v850 = vld [vmem:[%s1 + $0xb8] sm:$0xff]
  %v851 = vld [vmem:[%s1 + $0xc0] sm:$0xff]
  %v852 = vld [vmem:[%s1 + $0xc8] sm:$0xff]
  %v853 = vld [vmem:[%s1 + $0xd0] sm:$0xff]
  %v854 = vld [vmem:[%s1 + $0xd8] sm:$0xff]
  %v855 = vld [vmem:[%s1 + $0xe0] sm:$0xff]
  %v856 = vld [vmem:[%s1 + $0xe8] sm:$0xff]
  %v857 = vld [vmem:[%s1 + $0xf0] sm:$0xff]
  %v858 = vld [vmem:[%s1 + $0xf8] sm:$0xff]
  %v859 = vld [vmem:[%s1 + $0x100] sm:$0xff]
  %v860 = vld [vmem:[%s1 + $0x108] sm:$0xff]
  %v861 = vld [vmem:[%s1 + $0x110] sm:$0xff]
  %v862 = vld [vmem:[%s1 + $0x118] sm:$0xff]
  %v863 = vld [vmem:[%s1 + $0x120] sm:$0xff]
  %v864 = vld [vmem:[%s1 + $0x128] sm:$0xff]
  %v865 = vld [vmem:[%s1 + $0x130] sm:$0xff]
  %v866 = vld [vmem:[%s1 + $0x138] sm:$0xff]
  %v867 = vld [vmem:[%s1 + $0x140] sm:$0xff]
  %v868 = vld [vmem:[%s1 + $0x148] sm:$0xff]
  %v869 = vld [vmem:[%s1 + $0x150] sm:$0xff]
  %v870 = vld [vmem:[%s1 + $0x158] sm:$0xff]
  %v871 = vld [vmem:[%s1 + $0x160] sm:$0xff]
  %v872 = vld [vmem:[%s1 + $0x168] sm:$0xff]
  %v873 = vld [vmem:[%s1 + $0x170] sm:$0xff]
  %v874 = vld [vmem:[%s1 + $0x178] sm:$0xff]
  %v875 = vld [vmem:[%s1 + $0x180] sm:$0xff]
  %v876 = vld [vmem:[%s1 + $0x188] sm:$0xff]
  %v877 = vld [vmem:[%s1 + $0x190] sm:$0xff]
  %v878 = vld [vmem:[%s1 + $0x198] sm:$0xff]
  %v879 = vld [vmem:[%s1 + $0x1a0] sm:$0xff]
  %v880 = vld [vmem:[%s1 + $0x1a8] sm:$0xff]
  %v881 = vld [vmem:[%s1 + $0x1b0] sm:$0xff]
  %v882 = vld [vmem:[%s1 + $0x1b8] sm:$0xff]
  %v883 = vld [vmem:[%s1 + $0x1c0] sm:$0xff]
  %v884 = vld [vmem:[%s1 + $0x1c8] sm:$0xff]
  %v885 = vld [vmem:[%s1 + $0x1d0] sm:$0xff]
  %v886 = vld [vmem:[%s1 + $0x1d8] sm:$0xff]
  %v887 = vld [vmem:[%s1 + $0x1e0] sm:$0xff]
  %v888 = vld [vmem:[%s1 + $0x1e8] sm:$0xff]
  %v889 = vld [vmem:[%s1 + $0x1f0] sm:$0xff]
  %v890 = vld [vmem:[%s1 + $0x1f8] sm:$0xff]
  %v891 = vld [vmem:[%s1 + $0x200] sm:$0xff]
  %v892 = vld [vmem:[%s1 + $0x208] sm:$0xff]
  %v893 = vld [vmem:[%s1 + $0x210] sm:$0xff]
  %v894 = vld [vmem:[%s1 + $0x218] sm:$0xff]
  %v895 = vld [vmem:[%s1 + $0x220] sm:$0xff]
  %v896 = vld [vmem:[%s1 + $0x228] sm:$0xff]
  %v897 = vld [vmem:[%s1 + $0x230] sm:$0xff]
  %v898 = vld [vmem:[%s1 + $0x238] sm:$0xff]
  %v899 = vld [vmem:[%s1 + $0x240] sm:$0xff]
  %v900 = vld [vmem:[%s1 + $0x248] sm:$0xff]
  %v901 = vld [vmem:[%s1 + $0x250] sm:$0xff]
  %v902 = vld [vmem:[%s1 + $0x258] sm:$0xff]
  %v903 = vld [vmem:[%s1 + $0x260] sm:$0xff]
  %v904 = vld [vmem:[%s1 + $0x268] sm:$0xff]
  %v905 = vld [vmem:[%s1 + $0x270] sm:$0xff]
  %v906 = vld [vmem:[%s1 + $0x278] sm:$0xff]
  %v907 = vld [vmem:[%s1 + $0x280] sm:$0xff]
  %v908 = vld [vmem:[%s1 + $0x288] sm:$0xff]
  %v909 = vld [vmem:[%s1 + $0x290] sm:$0xff]
  %v910 = vld [vmem:[%s1 + $0x298] sm:$0xff]
  %v911 = vld [vmem:[%s1 + $0x2a0] sm:$0xff]
  %v912 = vld [vmem:[%s1 + $0x2a8] sm:$0xff]
  %v913 = vld [vmem:[%s1 + $0x2b0] sm:$0xff]
  %v914 = vld [vmem:[%s1 + $0x2b8] sm:$0xff]
  %v915 = vld [vmem:[%s1 + $0x2c0] sm:$0xff]
  %v916 = vld [vmem:[%s1 + $0x2c8] sm:$0xff]
  %v917 = vld [vmem:[%s1 + $0x2d0] sm:$0xff]
  %v918 = vld [vmem:[%s1 + $0x2d8] sm:$0xff]
  %v919 = vld [vmem:[%s1 + $0x2e0] sm:$0xff]
  %v920 = vld [vmem:[%s1 + $0x2e8] sm:$0xff]
  %v921 = vld [vmem:[%s1 + $0x2f0] sm:$0xff]
  %v922 = vld [vmem:[%s1 + $0x2f8] sm:$0xff]
  %v923 = vld [vmem:[%s1 + $0x300] sm:$0xff]
  %v924 = vld [vmem:[%s1 + $0x308] sm:$0xff]
  %v925 = vld [vmem:[%s1 + $0x310] sm:$0xff]
  %v926 = vld [vmem:[%s1 + $0x318] sm:$0xff]
  %v927 = vld [vmem:[%s1 + $0x320] sm:$0xff]
  %v928 = vld [vmem:[%s1 + $0x328] sm:$0xff]
  %v929 = vld [vmem:[%s1 + $0x330] sm:$0xff]
  %v930 = vld [vmem:[%s1 + $0x338] sm:$0xff]
  %v931 = vld [vmem:[%s1 + $0x340] sm:$0xff]
  %v932 = vld [vmem:[%s1 + $0x348] sm:$0xff]
  %v933 = vld [vmem:[%s1 + $0x350] sm:$0xff]
  %v934 = vld [vmem:[%s1 + $0x358] sm:$0xff]
  %v935 = vld [vmem:[%s1 + $0x360] sm:$0xff]
  %v936 = vld [vmem:[%s1 + $0x368] sm:$0xff]
  %v937 = vld [vmem:[%s1 + $0x370] sm:$0xff]
  %v938 = vld [vmem:[%s1 + $0x378] sm:$0xff]
  %v939 = vld [vmem:[%s1 + $0x380] sm:$0xff]
  %v940 = vld [vmem:[%s1 + $0x388] sm:$0xff]
  %v941 = vld [vmem:[%s1 + $0x390] sm:$0xff]
  %v942 = vld [vmem:[%s1 + $0x398] sm:$0xff]
  %v943 = vld [vmem:[%s1 + $0x3a0] sm:$0xff]
  %v944 = vld [vmem:[%s1 + $0x3a8] sm:$0xff]
  %v945 = vld [vmem:[%s1 + $0x3b0] sm:$0xff]
  %v946 = vld [vmem:[%s1 + $0x3b8] sm:$0xff]
  %v947 = vld [vmem:[%s1 + $0x3c0] sm:$0xff]
  %v948 = vld [vmem:[%s1 + $0x3c8] sm:$0xff]
  %v949 = vld [vmem:[%s1 + $0x3d0] sm:$0xff]
  %v950 = vld [vmem:[%s1 + $0x3d8] sm:$0xff]
  %v951 = vld [vmem:[%s1 + $0x3e0] sm:$0xff]
  %v952 = vld [vmem:[%s1 + $0x3e8] sm:$0xff]
  %v953 = vld [vmem:[%s1 + $0x3f0] sm:$0xff]
  %v954 = vld [vmem:[%s1 + $0x3f8] sm:$0xff]
  %v955 = vld [vmem:[%s1 + $0x400] sm:$0xff]
  %v956 = vld [vmem:[%s1 + $0x408] sm:$0xff]
  %v957 = vld [vmem:[%s1 + $0x410] sm:$0xff]
  %v958 = vld [vmem:[%s1 + $0x418] sm:$0xff]
  %v959 = vld [vmem:[%s1 + $0x420] sm:$0xff]
  %v960 = vld [vmem:[%s1 + $0x428] sm:$0xff]
  %v961 = vld [vmem:[%s1 + $0x430] sm:$0xff]
  %v962 = vld [vmem:[%s1 + $0x438] sm:$0xff]
  %v963 = vld [vmem:[%s1 + $0x440] sm:$0xff]
  %v964 = vld [vmem:[%s1 + $0x448] sm:$0xff]
  %v965 = vld [vmem:[%s1 + $0x450] sm:$0xff]
  %v966 = vld [vmem:[%s1 + $0x458] sm:$0xff]
  %v967 = vld [vmem:[%s1 + $0x460] sm:$0xff]
  %v968 = vld [vmem:[%s1 + $0x468] sm:$0xff]
  %v969 = vld [vmem:[%s1 + $0x470] sm:$0xff]
  %v970 = vld [vmem:[%s1 + $0x478] sm:$0xff]
  %v971 = vld [vmem:[%s1 + $0x480] sm:$0xff]
  %v972 = vld [vmem:[%s1 + $0x488] sm:$0xff]
  %v973 = vld [vmem:[%s1 + $0x490] sm:$0xff]
  %v974 = vld [vmem:[%s1 + $0x498] sm:$0xff]
  %v975 = vld [vmem:[%s1 + $0x4a0] sm:$0xff]
  %v976 = vld [vmem:[%s1 + $0x4a8] sm:$0xff]
  %v977 = vld [vmem:[%s1 + $0x4b0] sm:$0xff]
  %v978 = vld [vmem:[%s1 + $0x4b8] sm:$0xff]
  %v979 = vld [vmem:[%s1 + $0x4c0] sm:$0xff]
  %v980 = vld [vmem:[%s1 + $0x4c8] sm:$0xff]
  %v981 = vld [vmem:[%s1 + $0x4d0] sm:$0xff]
  %v982 = vld [vmem:[%s1 + $0x4d8] sm:$0xff]
  %v983 = vld [vmem:[%s1 + $0x4e0] sm:$0xff]
  %v984 = vld [vmem:[%s1 + $0x4e8] sm:$0xff]
  %v985 = vld [vmem:[%s1 + $0x4f0] sm:$0xff]
  %v986 = vld [vmem:[%s1 + $0x4f8] sm:$0xff]
  %v987 = vld [vmem:[%s1 + $0x500] sm:$0xff]
  %v988 = vld [vmem:[%s1 + $0x508] sm:$0xff]
  %v989 = vld [vmem:[%s1 + $0x510] sm:$0xff]
  %v990 = vld [vmem:[%s1 + $0x518] sm:$0xff]
  %v991 = vld [vmem:[%s1 + $0x520] sm:$0xff]
  %v992 = vld [vmem:[%s1 + $0x528] sm:$0xff]
  %v993 = vld [vmem:[%s1 + $0x530] sm:$0xff]
  %v994 = vld [vmem:[%s1 + $0x538] sm:$0xff]
  %v995 = vld [vmem:[%s1 + $0x540] sm:$0xff]
  %v996 = vld [vmem:[%s1 + $0x548] sm:$0xff]
  %v997 = vld [vmem:[%s1 + $0x550] sm:$0xff]
  %v998 = vld [vmem:[%s1 + $0x558] sm:$0xff]
  %v999 = vld [vmem:[%s1 + $0x560] sm:$0xff]
  %v1000 = vld [vmem:[%s1 + $0x568] sm:$0xff]
  %v1001 = vld [vmem:[%s1 + $0x570] sm:$0xff]
  %v1002 = vld [vmem:[%s1 + $0x578] sm:$0xff]
  %v1003 = vld [vmem:[%s1 + $0x580] sm:$0xff]
  %v1004 = vld [vmem:[%s1 + $0x588] sm:$0xff]
  %v1005 = vld [vmem:[%s1 + $0x590] sm:$0xff]
  %v1006 = vld [vmem:[%s1 + $0x598] sm:$0xff]
  %v1007 = vld [vmem:[%s1 + $0x5a0] sm:$0xff]
  %v1008 = vld [vmem:[%s1 + $0x5a8] sm:$0xff]
  %v1009 = vld [vmem:[%s1 + $0x5b0] sm:$0xff]
  %v1010 = vld [vmem:[%s1 + $0x5b8] sm:$0xff]
  %v1011 = vld [vmem:[%s1 + $0x5c0] sm:$0xff]
  %v1012 = vld [vmem:[%s1 + $0x5c8] sm:$0xff]
  %v1013 = vld [vmem:[%s1 + $0x5d0] sm:$0xff]
  %v1014 = vld [vmem:[%s1 + $0x5d8] sm:$0xff]
  %v1015 = vld [vmem:[%s1 + $0x5e0] sm:$0xff]
  %v1016 = vld [vmem:[%s1 + $0x5e8] sm:$0xff]
  %v1017 = vld [vmem:[%s1 + $0x5f0] sm:$0xff]
  %v1018 = vld [vmem:[%s1 + $0x5f8] sm:$0xff]
  %v1019 = vld [vmem:[%s1 + $0x600] sm:$0xff]
  %v1020 = vld [vmem:[%s1 + $0x608] sm:$0xff]
  %v1021 = vld [vmem:[%s1 + $0x610] sm:$0xff]
  %v1022 = vld [vmem:[%s1 + $0x618] sm:$0xff]
  %v1023 = vld [vmem:[%s1 + $0x620] sm:$0xff]
  %v1024 = vld [vmem:[%s1 + $0x628] sm:$0xff]
  %v1025 = vld [vmem:[%s1 + $0x630] sm:$0xff]
  %v1026 = vld [vmem:[%s1 + $0x638] sm:$0xff]
  %v1027 = vld [vmem:[%s1 + $0x640] sm:$0xff]
  %v1028 = vld [vmem:[%s1 + $0x648] sm:$0xff]
  %v1029 = vld [vmem:[%s1 + $0x650] sm:$0xff]
  %v1030 = vld [vmem:[%s1 + $0x658] sm:$0xff]
  %v1031 = vld [vmem:[%s1 + $0x660] sm:$0xff]
  %v1032 = vld [vmem:[%s1 + $0x668] sm:$0xff]
  %v1033 = vld [vmem:[%s1 + $0x670] sm:$0xff]
  %v1034 = vld [vmem:[%s1 + $0x678] sm:$0xff]
  %vm1035 = vcmask 785408
  %v1037 = vsel %vm1035, %v839, 0
  %v1040 = vsel %vm1035, %v852, 0
  %v1043 = vsel %vm1035, %v865, 0
  %v1046 = vsel %vm1035, %v878, 0
  %v1049 = vsel %vm1035, %v891, 0
  %v1052 = vsel %vm1035, %v904, 0
  %v1055 = vsel %vm1035, %v917, 0
  %v1058 = vsel %vm1035, %v930, 0
  %v1061 = vsel %vm1035, %v943, 0
  %v1064 = vsel %vm1035, %v956, 0
  %v1067 = vsel %vm1035, %v969, 0
  %v1070 = vsel %vm1035, %v982, 0
  %v1073 = vsel %vm1035, %v995, 0
  %v1076 = vsel %vm1035, %v1008, 0
  %v1079 = vsel %vm1035, %v1021, 0
  %v1082 = vsel %vm1035, %v1034, 0
  %1084 = vmatprep.subr.mxu0 %v450
  %1085 = vmatpush1.msra.mxu0 %v449
  %1086 = vmatprep.subr.mxu0 %v448
  %1087 = vmatpush1.msra.mxu0 %v447
  %1088 = vmatprep.subr.mxu0 %v446
  %1089 = vmatpush1.msra.mxu0 %v445
  %1090 = vmatprep.subr.mxu0 %v444
  %1091 = vmatpush1.msra.mxu0 %v443
  %1092 = vmatprep.subr.mxu0 %v442
  %1093 = vmatpush1.msra.mxu0 %v441
  %1094 = vmatprep.subr.mxu0 %v440
  %1095 = vmatpush1.msra.mxu0 %v439
  %1096 = vmatprep.subr.mxu0 %v438
  %1097 = vmatpush1.msra.mxu0 %v437
  %1098 = vmatprep.subr.mxu0 %v436
  %1099 = vmatpush1.msra.mxu0 %v435
  %1100 = vmatprep.subr.mxu0 %v434
  %1101 = vmatpush1.msra.mxu0 %v433
  %1102 = vmatprep.subr.mxu0 %v432
  %1103 = vmatpush1.msra.mxu0 %v431
  %1104 = vmatprep.subr.mxu0 %v430
  %1105 = vmatpush1.msra.mxu0 %v429
  %1106 = vmatprep.subr.mxu0 %v428
  %1107 = vmatpush1.msra.mxu0 %v427
  %1108 = vmatprep.subr.mxu0 %v426
  %1109 = vmatpush1.msra.mxu0 %v425
  %1110 = vmatprep.subr.mxu0 %v424
  %1111 = vmatpush1.msra.mxu0 %v423
  %1112 = vmatprep.subr.mxu0 %v422
  %1113 = vmatpush1.msra.mxu0 %v421
  %1114 = vmatprep.subr.mxu0 %v420
  %1115 = vmatpush1.msra.mxu0 %v419
  %1116 = vmatprep.subr.mxu0 %v482
  %1117 = vmatpush2.msra.mxu0 %v481
  %1118 = vmatprep.subr.mxu0 %v480
  %1119 = vmatpush2.msra.mxu0 %v479
  %1120 = vmatprep.subr.mxu0 %v478
  %1121 = vmatpush2.msra.mxu0 %v477
  %1122 = vmatprep.subr.mxu0 %v476
  %1123 = vmatpush2.msra.mxu0 %v475
  %1124 = vmatprep.subr.mxu0 %v474
  %1125 = vmatpush2.msra.mxu0 %v473
  %1126 = vmatprep.subr.mxu0 %v472
  %1127 = vmatpush2.msra.mxu0 %v471
  %1128 = vmatprep.subr.mxu0 %v470
  %1129 = vmatpush2.msra.mxu0 %v469
  %1130 = vmatprep.subr.mxu0 %v468
  %1131 = vmatpush2.msra.mxu0 %v467
  %1132 = vmatprep.subr.mxu0 %v466
  %1133 = vmatpush2.msra.mxu0 %v465
  %1134 = vmatprep.subr.mxu0 %v464
  %1135 = vmatpush2.msra.mxu0 %v463
  %1136 = vmatprep.subr.mxu0 %v462
  %1137 = vmatpush2.msra.mxu0 %v461
  %1138 = vmatprep.subr.mxu0 %v460
  %1139 = vmatpush2.msra.mxu0 %v459
  %1140 = vmatprep.subr.mxu0 %v458
  %1141 = vmatpush2.msra.mxu0 %v457
  %1142 = vmatprep.subr.mxu0 %v456
  %1143 = vmatpush2.msra.mxu0 %v455
  %1144 = vmatprep.subr.mxu0 %v454
  %1145 = vmatpush2.msra.mxu0 %v453
  %1146 = vmatprep.subr.mxu0 %v452
  %1147 = vmatpush2.msra.mxu0 %v451
  %1148 = vmatprep.mubr.f32.mxu0 %v828
  %1149 = vmatmul.mubr.f32.gmra.mxu0 %v827
  %v1150 = vpop.f32.mrf.mxu0
  %v1151 = vadd.f32 0.0, %v1150
  %v1152 = vpop.f32.mrf.mxu0
  %v1153 = vadd.f32 0.0, %v1152
  %1154 = vmatprep.mubr.f32.mxu0 %v841
  %1155 = vmatmul.mubr.f32.gmra.mxu0 %v840
  %v1156 = vpop.f32.mrf.mxu0
  %v1157 = vadd.f32 0.0, %v1156
  %v1158 = vpop.f32.mrf.mxu0
  %v1159 = vadd.f32 0.0, %v1158
  %1160 = vmatprep.mubr.f32.mxu0 %v854
  %1161 = vmatmul.mubr.f32.gmra.mxu0 %v853
  %v1162 = vpop.f32.mrf.mxu0
  %v1163 = vadd.f32 0.0, %v1162
  %v1164 = vpop.f32.mrf.mxu0
  %v1165 = vadd.f32 0.0, %v1164
  %1166 = vmatprep.mubr.f32.mxu0 %v867
  %1167 = vmatmul.mubr.f32.gmra.mxu0 %v866
  %v1168 = vpop.f32.mrf.mxu0
  %v1169 = vadd.f32 0.0, %v1168
  %v1170 = vpop.f32.mrf.mxu0
  %v1171 = vadd.f32 0.0, %v1170
  %1172 = vmatprep.mubr.f32.mxu0 %v880
  %1173 = vmatmul.mubr.f32.gmra.mxu0 %v879
  %v1174 = vpop.f32.mrf.mxu0
  %v1175 = vadd.f32 0.0, %v1174
  %v1176 = vpop.f32.mrf.mxu0
  %v1177 = vadd.f32 0.0, %v1176
  %1178 = vmatprep.mubr.f32.mxu0 %v893
  %1179 = vmatmul.mubr.f32.gmra.mxu0 %v892
  %v1180 = vpop.f32.mrf.mxu0
  %v1181 = vadd.f32 0.0, %v1180
  %v1182 = vpop.f32.mrf.mxu0
  %v1183 = vadd.f32 0.0, %v1182
  %1184 = vmatprep.mubr.f32.mxu0 %v906
  %1185 = vmatmul.mubr.f32.gmra.mxu0 %v905
  %v1186 = vpop.f32.mrf.mxu0
  %v1187 = vadd.f32 0.0, %v1186
  %v1188 = vpop.f32.mrf.mxu0
  %v1189 = vadd.f32 0.0, %v1188
  %1190 = vmatprep.mubr.f32.mxu0 %v919
  %1191 = vmatmul.mubr.f32.gmra.mxu0 %v918
  %v1192 = vpop.f32.mrf.mxu0
  %v1193 = vadd.f32 0.0, %v1192
  %v1194 = vpop.f32.mrf.mxu0
  %v1195 = vadd.f32 0.0, %v1194
  %1196 = vmatprep.mubr.f32.mxu0 %v932
  %1197 = vmatmul.mubr.f32.gmra.mxu0 %v931
  %v1198 = vpop.f32.mrf.mxu0
  %v1199 = vadd.f32 0.0, %v1198
  %v1200 = vpop.f32.mrf.mxu0
  %v1201 = vadd.f32 0.0, %v1200
  %1202 = vmatprep.mubr.f32.mxu0 %v945
  %1203 = vmatmul.mubr.f32.gmra.mxu0 %v944
  %v1204 = vpop.f32.mrf.mxu0
  %v1205 = vadd.f32 0.0, %v1204
  %v1206 = vpop.f32.mrf.mxu0
  %v1207 = vadd.f32 0.0, %v1206
  %1208 = vmatprep.mubr.f32.mxu0 %v958
  %1209 = vmatmul.mubr.f32.gmra.mxu0 %v957
  %v1210 = vpop.f32.mrf.mxu0
  %v1211 = vadd.f32 0.0, %v1210
  %v1212 = vpop.f32.mrf.mxu0
  %v1213 = vadd.f32 0.0, %v1212
  %1214 = vmatprep.mubr.f32.mxu0 %v971
  %1215 = vmatmul.mubr.f32.gmra.mxu0 %v970
  %v1216 = vpop.f32.mrf.mxu0
  %v1217 = vadd.f32 0.0, %v1216
  %v1218 = vpop.f32.mrf.mxu0
  %v1219 = vadd.f32 0.0, %v1218
  %1220 = vmatprep.mubr.f32.mxu0 %v984
  %1221 = vmatmul.mubr.f32.gmra.mxu0 %v983
  %v1222 = vpop.f32.mrf.mxu0
  %v1223 = vadd.f32 0.0, %v1222
  %v1224 = vpop.f32.mrf.mxu0
  %v1225 = vadd.f32 0.0, %v1224
  %1226 = vmatprep.mubr.f32.mxu0 %v997
  %1227 = vmatmul.mubr.f32.gmra.mxu0 %v996
  %v1228 = vpop.f32.mrf.mxu0
  %v1229 = vadd.f32 0.0, %v1228
  %v1230 = vpop.f32.mrf.mxu0
  %v1231 = vadd.f32 0.0, %v1230
  %1232 = vmatprep.mubr.f32.mxu0 %v1010
  %1233 = vmatmul.mubr.f32.gmra.mxu0 %v1009
  %v1234 = vpop.f32.mrf.mxu0
  %v1235 = vadd.f32 0.0, %v1234
  %v1236 = vpop.f32.mrf.mxu0
  %v1237 = vadd.f32 0.0, %v1236
  %1238 = vmatprep.mubr.f32.mxu0 %v1023
  %1239 = vmatmul.mubr.f32.gmra.mxu0 %v1022
  %v1240 = vpop.f32.mrf.mxu0
  %v1241 = vadd.f32 0.0, %v1240
  %v1242 = vpop.f32.mrf.mxu0
  %v1243 = vadd.f32 0.0, %v1242
  %1244 = vdwg.mxu0
  %1245 = vmatprep.subr.mxu0 %v514
  %1246 = vmatpush1.msra.mxu0 %v513
  %1247 = vmatprep.subr.mxu0 %v512
  %1248 = vmatpush1.msra.mxu0 %v511
  %1249 = vmatprep.subr.mxu0 %v510
  %1250 = vmatpush1.msra.mxu0 %v509
  %1251 = vmatprep.subr.mxu0 %v508
  %1252 = vmatpush1.msra.mxu0 %v507
  %1253 = vmatprep.subr.mxu0 %v506
  %1254 = vmatpush1.msra.mxu0 %v505
  %1255 = vmatprep.subr.mxu0 %v504
  %1256 = vmatpush1.msra.mxu0 %v503
  %1257 = vmatprep.subr.mxu0 %v502
  %1258 = vmatpush1.msra.mxu0 %v501
  %1259 = vmatprep.subr.mxu0 %v500
  %1260 = vmatpush1.msra.mxu0 %v499
  %1261 = vmatprep.subr.mxu0 %v498
  %1262 = vmatpush1.msra.mxu0 %v497
  %1263 = vmatprep.subr.mxu0 %v496
  %1264 = vmatpush1.msra.mxu0 %v495
  %1265 = vmatprep.subr.mxu0 %v494
  %1266 = vmatpush1.msra.mxu0 %v493
  %1267 = vmatprep.subr.mxu0 %v492
  %1268 = vmatpush1.msra.mxu0 %v491
  %1269 = vmatprep.subr.mxu0 %v490
  %1270 = vmatpush1.msra.mxu0 %v489
  %1271 = vmatprep.subr.mxu0 %v488
  %1272 = vmatpush1.msra.mxu0 %v487
  %1273 = vmatprep.subr.mxu0 %v486
  %1274 = vmatpush1.msra.mxu0 %v485
  %1275 = vmatprep.subr.mxu0 %v484
  %1276 = vmatpush1.msra.mxu0 %v483
  %1277 = vmatprep.subr.mxu0 %v546
  %1278 = vmatpush2.msra.mxu0 %v545
  %1279 = vmatprep.subr.mxu0 %v544
  %1280 = vmatpush2.msra.mxu0 %v543
  %1281 = vmatprep.subr.mxu0 %v542
  %1282 = vmatpush2.msra.mxu0 %v541
  %1283 = vmatprep.subr.mxu0 %v540
  %1284 = vmatpush2.msra.mxu0 %v539
  %1285 = vmatprep.subr.mxu0 %v538
  %1286 = vmatpush2.msra.mxu0 %v537
  %1287 = vmatprep.subr.mxu0 %v536
  %1288 = vmatpush2.msra.mxu0 %v535
  %1289 = vmatprep.subr.mxu0 %v534
  %1290 = vmatpush2.msra.mxu0 %v533
  %1291 = vmatprep.subr.mxu0 %v532
  %1292 = vmatpush2.msra.mxu0 %v531
  %1293 = vmatprep.subr.mxu0 %v530
  %1294 = vmatpush2.msra.mxu0 %v529
  %1295 = vmatprep.subr.mxu0 %v528
  %1296 = vmatpush2.msra.mxu0 %v527
  %1297 = vmatprep.subr.mxu0 %v526
  %1298 = vmatpush2.msra.mxu0 %v525
  %1299 = vmatprep.subr.mxu0 %v524
  %1300 = vmatpush2.msra.mxu0 %v523
  %1301 = vmatprep.subr.mxu0 %v522
  %1302 = vmatpush2.msra.mxu0 %v521
  %1303 = vmatprep.subr.mxu0 %v520
  %1304 = vmatpush2.msra.mxu0 %v519
  %1305 = vmatprep.subr.mxu0 %v518
  %1306 = vmatpush2.msra.mxu0 %v517
  %1307 = vmatprep.subr.mxu0 %v516
  %1308 = vmatpush2.msra.mxu0 %v515
  %1309 = vmatprep.mubr.f32.mxu0 %v830
  %1310 = vmatmul.mubr.f32.gmra.mxu0 %v829
  %v1311 = vpop.f32.mrf.mxu0
  %v1312 = vadd.f32 %v1151, %v1311
  %v1313 = vpop.f32.mrf.mxu0
  %v1314 = vadd.f32 %v1153, %v1313
  %1315 = vmatprep.mubr.f32.mxu0 %v843
  %1316 = vmatmul.mubr.f32.gmra.mxu0 %v842
  %v1317 = vpop.f32.mrf.mxu0
  %v1318 = vadd.f32 %v1157, %v1317
  %v1319 = vpop.f32.mrf.mxu0
  %v1320 = vadd.f32 %v1159, %v1319
  %1321 = vmatprep.mubr.f32.mxu0 %v856
  %1322 = vmatmul.mubr.f32.gmra.mxu0 %v855
  %v1323 = vpop.f32.mrf.mxu0
  %v1324 = vadd.f32 %v1163, %v1323
  %v1325 = vpop.f32.mrf.mxu0
  %v1326 = vadd.f32 %v1165, %v1325
  %1327 = vmatprep.mubr.f32.mxu0 %v869
  %1328 = vmatmul.mubr.f32.gmra.mxu0 %v868
  %v1329 = vpop.f32.mrf.mxu0
  %v1330 = vadd.f32 %v1169, %v1329
  %v1331 = vpop.f32.mrf.mxu0
  %v1332 = vadd.f32 %v1171, %v1331
  %1333 = vmatprep.mubr.f32.mxu0 %v882
  %1334 = vmatmul.mubr.f32.gmra.mxu0 %v881
  %v1335 = vpop.f32.mrf.mxu0
  %v1336 = vadd.f32 %v1175, %v1335
  %v1337 = vpop.f32.mrf.mxu0
  %v1338 = vadd.f32 %v1177, %v1337
  %1339 = vmatprep.mubr.f32.mxu0 %v895
  %1340 = vmatmul.mubr.f32.gmra.mxu0 %v894
  %v1341 = vpop.f32.mrf.mxu0
  %v1342 = vadd.f32 %v1181, %v1341
  %v1343 = vpop.f32.mrf.mxu0
  %v1344 = vadd.f32 %v1183, %v1343
  %1345 = vmatprep.mubr.f32.mxu0 %v908
  %1346 = vmatmul.mubr.f32.gmra.mxu0 %v907
  %v1347 = vpop.f32.mrf.mxu0
  %v1348 = vadd.f32 %v1187, %v1347
  %v1349 = vpop.f32.mrf.mxu0
  %v1350 = vadd.f32 %v1189, %v1349
  %1351 = vmatprep.mubr.f32.mxu0 %v921
  %1352 = vmatmul.mubr.f32.gmra.mxu0 %v920
  %v1353 = vpop.f32.mrf.mxu0
  %v1354 = vadd.f32 %v1193, %v1353
  %v1355 = vpop.f32.mrf.mxu0
  %v1356 = vadd.f32 %v1195, %v1355
  %1357 = vmatprep.mubr.f32.mxu0 %v934
  %1358 = vmatmul.mubr.f32.gmra.mxu0 %v933
  %v1359 = vpop.f32.mrf.mxu0
  %v1360 = vadd.f32 %v1199, %v1359
  %v1361 = vpop.f32.mrf.mxu0
  %v1362 = vadd.f32 %v1201, %v1361
  %1363 = vmatprep.mubr.f32.mxu0 %v947
  %1364 = vmatmul.mubr.f32.gmra.mxu0 %v946
  %v1365 = vpop.f32.mrf.mxu0
  %v1366 = vadd.f32 %v1205, %v1365
  %v1367 = vpop.f32.mrf.mxu0
  %v1368 = vadd.f32 %v1207, %v1367
  %1369 = vmatprep.mubr.f32.mxu0 %v960
  %1370 = vmatmul.mubr.f32.gmra.mxu0 %v959
  %v1371 = vpop.f32.mrf.mxu0
  %v1372 = vadd.f32 %v1211, %v1371
  %v1373 = vpop.f32.mrf.mxu0
  %v1374 = vadd.f32 %v1213, %v1373
  %1375 = vmatprep.mubr.f32.mxu0 %v973
  %1376 = vmatmul.mubr.f32.gmra.mxu0 %v972
  %v1377 = vpop.f32.mrf.mxu0
  %v1378 = vadd.f32 %v1217, %v1377
  %v1379 = vpop.f32.mrf.mxu0
  %v1380 = vadd.f32 %v1219, %v1379
  %1381 = vmatprep.mubr.f32.mxu0 %v986
  %1382 = vmatmul.mubr.f32.gmra.mxu0 %v985
  %v1383 = vpop.f32.mrf.mxu0
  %v1384 = vadd.f32 %v1223, %v1383
  %v1385 = vpop.f32.mrf.mxu0
  %v1386 = vadd.f32 %v1225, %v1385
  %1387 = vmatprep.mubr.f32.mxu0 %v999
  %1388 = vmatmul.mubr.f32.gmra.mxu0 %v998
  %v1389 = vpop.f32.mrf.mxu0
  %v1390 = vadd.f32 %v1229, %v1389
  %v1391 = vpop.f32.mrf.mxu0
  %v1392 = vadd.f32 %v1231, %v1391
  %1393 = vmatprep.mubr.f32.mxu0 %v1012
  %1394 = vmatmul.mubr.f32.gmra.mxu0 %v1011
  %v1395 = vpop.f32.mrf.mxu0
  %v1396 = vadd.f32 %v1235, %v1395
  %v1397 = vpop.f32.mrf.mxu0
  %v1398 = vadd.f32 %v1237, %v1397
  %1399 = vmatprep.mubr.f32.mxu0 %v1025
  %1400 = vmatmul.mubr.f32.gmra.mxu0 %v1024
  %v1401 = vpop.f32.mrf.mxu0
  %v1402 = vadd.f32 %v1241, %v1401
  %v1403 = vpop.f32.mrf.mxu0
  %v1404 = vadd.f32 %v1243, %v1403
  %1405 = vdwg.mxu0
  %1406 = vmatprep.subr.mxu0 %v578
  %1407 = vmatpush1.msra.mxu0 %v577
  %1408 = vmatprep.subr.mxu0 %v576
  %1409 = vmatpush1.msra.mxu0 %v575
  %1410 = vmatprep.subr.mxu0 %v574
  %1411 = vmatpush1.msra.mxu0 %v573
  %1412 = vmatprep.subr.mxu0 %v572
  %1413 = vmatpush1.msra.mxu0 %v571
  %1414 = vmatprep.subr.mxu0 %v570
  %1415 = vmatpush1.msra.mxu0 %v569
  %1416 = vmatprep.subr.mxu0 %v568
  %1417 = vmatpush1.msra.mxu0 %v567
  %1418 = vmatprep.subr.mxu0 %v566
  %1419 = vmatpush1.msra.mxu0 %v565
  %1420 = vmatprep.subr.mxu0 %v564
  %1421 = vmatpush1.msra.mxu0 %v563
  %1422 = vmatprep.subr.mxu0 %v562
  %1423 = vmatpush1.msra.mxu0 %v561
  %1424 = vmatprep.subr.mxu0 %v560
  %1425 = vmatpush1.msra.mxu0 %v559
  %1426 = vmatprep.subr.mxu0 %v558
  %1427 = vmatpush1.msra.mxu0 %v557
  %1428 = vmatprep.subr.mxu0 %v556
  %1429 = vmatpush1.msra.mxu0 %v555
  %1430 = vmatprep.subr.mxu0 %v554
  %1431 = vmatpush1.msra.mxu0 %v553
  %1432 = vmatprep.subr.mxu0 %v552
  %1433 = vmatpush1.msra.mxu0 %v551
  %1434 = vmatprep.subr.mxu0 %v550
  %1435 = vmatpush1.msra.mxu0 %v549
  %1436 = vmatprep.subr.mxu0 %v548
  %1437 = vmatpush1.msra.mxu0 %v547
  %1438 = vmatprep.subr.mxu0 %v610
  %1439 = vmatpush2.msra.mxu0 %v609
  %1440 = vmatprep.subr.mxu0 %v608
  %1441 = vmatpush2.msra.mxu0 %v607
  %1442 = vmatprep.subr.mxu0 %v606
  %1443 = vmatpush2.msra.mxu0 %v605
  %1444 = vmatprep.subr.mxu0 %v604
  %1445 = vmatpush2.msra.mxu0 %v603
  %1446 = vmatprep.subr.mxu0 %v602
  %1447 = vmatpush2.msra.mxu0 %v601
  %1448 = vmatprep.subr.mxu0 %v600
  %1449 = vmatpush2.msra.mxu0 %v599
  %1450 = vmatprep.subr.mxu0 %v598
  %1451 = vmatpush2.msra.mxu0 %v597
  %1452 = vmatprep.subr.mxu0 %v596
  %1453 = vmatpush2.msra.mxu0 %v595
  %1454 = vmatprep.subr.mxu0 %v594
  %1455 = vmatpush2.msra.mxu0 %v593
  %1456 = vmatprep.subr.mxu0 %v592
  %1457 = vmatpush2.msra.mxu0 %v591
  %1458 = vmatprep.subr.mxu0 %v590
  %1459 = vmatpush2.msra.mxu0 %v589
  %1460 = vmatprep.subr.mxu0 %v588
  %1461 = vmatpush2.msra.mxu0 %v587
  %1462 = vmatprep.subr.mxu0 %v586
  %1463 = vmatpush2.msra.mxu0 %v585
  %1464 = vmatprep.subr.mxu0 %v584
  %1465 = vmatpush2.msra.mxu0 %v583
  %1466 = vmatprep.subr.mxu0 %v582
  %1467 = vmatpush2.msra.mxu0 %v581
  %1468 = vmatprep.subr.mxu0 %v580
  %1469 = vmatpush2.msra.mxu0 %v579
  %1470 = vmatprep.mubr.f32.mxu0 %v832
  %1471 = vmatmul.mubr.f32.gmra.mxu0 %v831
  %v1472 = vpop.f32.mrf.mxu0
  %v1473 = vadd.f32 %v1312, %v1472
  %v1474 = vpop.f32.mrf.mxu0
  %v1475 = vadd.f32 %v1314, %v1474
  %1476 = vmatprep.mubr.f32.mxu0 %v845
  %1477 = vmatmul.mubr.f32.gmra.mxu0 %v844
  %v1478 = vpop.f32.mrf.mxu0
  %v1479 = vadd.f32 %v1318, %v1478
  %v1480 = vpop.f32.mrf.mxu0
  %v1481 = vadd.f32 %v1320, %v1480
  %1482 = vmatprep.mubr.f32.mxu0 %v858
  %1483 = vmatmul.mubr.f32.gmra.mxu0 %v857
  %v1484 = vpop.f32.mrf.mxu0
  %v1485 = vadd.f32 %v1324, %v1484
  %v1486 = vpop.f32.mrf.mxu0
  %v1487 = vadd.f32 %v1326, %v1486
  %1488 = vmatprep.mubr.f32.mxu0 %v871
  %1489 = vmatmul.mubr.f32.gmra.mxu0 %v870
  %v1490 = vpop.f32.mrf.mxu0
  %v1491 = vadd.f32 %v1330, %v1490
  %v1492 = vpop.f32.mrf.mxu0
  %v1493 = vadd.f32 %v1332, %v1492
  %1494 = vmatprep.mubr.f32.mxu0 %v884
  %1495 = vmatmul.mubr.f32.gmra.mxu0 %v883
  %v1496 = vpop.f32.mrf.mxu0
  %v1497 = vadd.f32 %v1336, %v1496
  %v1498 = vpop.f32.mrf.mxu0
  %v1499 = vadd.f32 %v1338, %v1498
  %1500 = vmatprep.mubr.f32.mxu0 %v897
  %1501 = vmatmul.mubr.f32.gmra.mxu0 %v896
  %v1502 = vpop.f32.mrf.mxu0
  %v1503 = vadd.f32 %v1342, %v1502
  %v1504 = vpop.f32.mrf.mxu0
  %v1505 = vadd.f32 %v1344, %v1504
  %1506 = vmatprep.mubr.f32.mxu0 %v910
  %1507 = vmatmul.mubr.f32.gmra.mxu0 %v909
  %v1508 = vpop.f32.mrf.mxu0
  %v1509 = vadd.f32 %v1348, %v1508
  %v1510 = vpop.f32.mrf.mxu0
  %v1511 = vadd.f32 %v1350, %v1510
  %1512 = vmatprep.mubr.f32.mxu0 %v923
  %1513 = vmatmul.mubr.f32.gmra.mxu0 %v922
  %v1514 = vpop.f32.mrf.mxu0
  %v1515 = vadd.f32 %v1354, %v1514
  %v1516 = vpop.f32.mrf.mxu0
  %v1517 = vadd.f32 %v1356, %v1516
  %1518 = vmatprep.mubr.f32.mxu0 %v936
  %1519 = vmatmul.mubr.f32.gmra.mxu0 %v935
  %v1520 = vpop.f32.mrf.mxu0
  %v1521 = vadd.f32 %v1360, %v1520
  %v1522 = vpop.f32.mrf.mxu0
  %v1523 = vadd.f32 %v1362, %v1522
  %1524 = vmatprep.mubr.f32.mxu0 %v949
  %1525 = vmatmul.mubr.f32.gmra.mxu0 %v948
  %v1526 = vpop.f32.mrf.mxu0
  %v1527 = vadd.f32 %v1366, %v1526
  %v1528 = vpop.f32.mrf.mxu0
  %v1529 = vadd.f32 %v1368, %v1528
  %1530 = vmatprep.mubr.f32.mxu0 %v962
  %1531 = vmatmul.mubr.f32.gmra.mxu0 %v961
  %v1532 = vpop.f32.mrf.mxu0
  %v1533 = vadd.f32 %v1372, %v1532
  %v1534 = vpop.f32.mrf.mxu0
  %v1535 = vadd.f32 %v1374, %v1534
  %1536 = vmatprep.mubr.f32.mxu0 %v975
  %1537 = vmatmul.mubr.f32.gmra.mxu0 %v974
  %v1538 = vpop.f32.mrf.mxu0
  %v1539 = vadd.f32 %v1378, %v1538
  %v1540 = vpop.f32.mrf.mxu0
  %v1541 = vadd.f32 %v1380, %v1540
  %1542 = vmatprep.mubr.f32.mxu0 %v988
  %1543 = vmatmul.mubr.f32.gmra.mxu0 %v987
  %v1544 = vpop.f32.mrf.mxu0
  %v1545 = vadd.f32 %v1384, %v1544
  %v1546 = vpop.f32.mrf.mxu0
  %v1547 = vadd.f32 %v1386, %v1546
  %1548 = vmatprep.mubr.f32.mxu0 %v1001
  %1549 = vmatmul.mubr.f32.gmra.mxu0 %v1000
  %v1550 = vpop.f32.mrf.mxu0
  %v1551 = vadd.f32 %v1390, %v1550
  %v1552 = vpop.f32.mrf.mxu0
  %v1553 = vadd.f32 %v1392, %v1552
  %1554 = vmatprep.mubr.f32.mxu0 %v1014
  %1555 = vmatmul.mubr.f32.gmra.mxu0 %v1013
  %v1556 = vpop.f32.mrf.mxu0
  %v1557 = vadd.f32 %v1396, %v1556
  %v1558 = vpop.f32.mrf.mxu0
  %v1559 = vadd.f32 %v1398, %v1558
  %1560 = vmatprep.mubr.f32.mxu0 %v1027
  %1561 = vmatmul.mubr.f32.gmra.mxu0 %v1026
  %v1562 = vpop.f32.mrf.mxu0
  %v1563 = vadd.f32 %v1402, %v1562
  %v1564 = vpop.f32.mrf.mxu0
  %v1565 = vadd.f32 %v1404, %v1564
  %1566 = vdwg.mxu0
  %1567 = vmatprep.subr.mxu0 %v642
  %1568 = vmatpush1.msra.mxu0 %v641
  %1569 = vmatprep.subr.mxu0 %v640
  %1570 = vmatpush1.msra.mxu0 %v639
  %1571 = vmatprep.subr.mxu0 %v638
  %1572 = vmatpush1.msra.mxu0 %v637
  %1573 = vmatprep.subr.mxu0 %v636
  %1574 = vmatpush1.msra.mxu0 %v635
  %1575 = vmatprep.subr.mxu0 %v634
  %1576 = vmatpush1.msra.mxu0 %v633
  %1577 = vmatprep.subr.mxu0 %v632
  %1578 = vmatpush1.msra.mxu0 %v631
  %1579 = vmatprep.subr.mxu0 %v630
  %1580 = vmatpush1.msra.mxu0 %v629
  %1581 = vmatprep.subr.mxu0 %v628
  %1582 = vmatpush1.msra.mxu0 %v627
  %1583 = vmatprep.subr.mxu0 %v626
  %1584 = vmatpush1.msra.mxu0 %v625
  %1585 = vmatprep.subr.mxu0 %v624
  %1586 = vmatpush1.msra.mxu0 %v623
  %1587 = vmatprep.subr.mxu0 %v622
  %1588 = vmatpush1.msra.mxu0 %v621
  %1589 = vmatprep.subr.mxu0 %v620
  %1590 = vmatpush1.msra.mxu0 %v619
  %1591 = vmatprep.subr.mxu0 %v618
  %1592 = vmatpush1.msra.mxu0 %v617
  %1593 = vmatprep.subr.mxu0 %v616
  %1594 = vmatpush1.msra.mxu0 %v615
  %1595 = vmatprep.subr.mxu0 %v614
  %1596 = vmatpush1.msra.mxu0 %v613
  %1597 = vmatprep.subr.mxu0 %v612
  %1598 = vmatpush1.msra.mxu0 %v611
  %1599 = vmatprep.subr.mxu0 %v674
  %1600 = vmatpush2.msra.mxu0 %v673
  %1601 = vmatprep.subr.mxu0 %v672
  %1602 = vmatpush2.msra.mxu0 %v671
  %1603 = vmatprep.subr.mxu0 %v670
  %1604 = vmatpush2.msra.mxu0 %v669
  %1605 = vmatprep.subr.mxu0 %v668
  %1606 = vmatpush2.msra.mxu0 %v667
  %1607 = vmatprep.subr.mxu0 %v666
  %1608 = vmatpush2.msra.mxu0 %v665
  %1609 = vmatprep.subr.mxu0 %v664
  %1610 = vmatpush2.msra.mxu0 %v663
  %1611 = vmatprep.subr.mxu0 %v662
  %1612 = vmatpush2.msra.mxu0 %v661
  %1613 = vmatprep.subr.mxu0 %v660
  %1614 = vmatpush2.msra.mxu0 %v659
  %1615 = vmatprep.subr.mxu0 %v658
  %1616 = vmatpush2.msra.mxu0 %v657
  %1617 = vmatprep.subr.mxu0 %v656
  %1618 = vmatpush2.msra.mxu0 %v655
  %1619 = vmatprep.subr.mxu0 %v654
  %1620 = vmatpush2.msra.mxu0 %v653
  %1621 = vmatprep.subr.mxu0 %v652
  %1622 = vmatpush2.msra.mxu0 %v651
  %1623 = vmatprep.subr.mxu0 %v650
  %1624 = vmatpush2.msra.mxu0 %v649
  %1625 = vmatprep.subr.mxu0 %v648
  %1626 = vmatpush2.msra.mxu0 %v647
  %1627 = vmatprep.subr.mxu0 %v646
  %1628 = vmatpush2.msra.mxu0 %v645
  %1629 = vmatprep.subr.mxu0 %v644
  %1630 = vmatpush2.msra.mxu0 %v643
  %1631 = vmatprep.mubr.f32.mxu0 %v834
  %1632 = vmatmul.mubr.f32.gmra.mxu0 %v833
  %v1633 = vpop.f32.mrf.mxu0
  %v1634 = vadd.f32 %v1473, %v1633
  %v1635 = vpop.f32.mrf.mxu0
  %v1636 = vadd.f32 %v1475, %v1635
  %1637 = vmatprep.mubr.f32.mxu0 %v847
  %1638 = vmatmul.mubr.f32.gmra.mxu0 %v846
  %v1639 = vpop.f32.mrf.mxu0
  %v1640 = vadd.f32 %v1479, %v1639
  %v1641 = vpop.f32.mrf.mxu0
  %v1642 = vadd.f32 %v1481, %v1641
  %1643 = vmatprep.mubr.f32.mxu0 %v860
  %1644 = vmatmul.mubr.f32.gmra.mxu0 %v859
  %v1645 = vpop.f32.mrf.mxu0
  %v1646 = vadd.f32 %v1485, %v1645
  %v1647 = vpop.f32.mrf.mxu0
  %v1648 = vadd.f32 %v1487, %v1647
  %1649 = vmatprep.mubr.f32.mxu0 %v873
  %1650 = vmatmul.mubr.f32.gmra.mxu0 %v872
  %v1651 = vpop.f32.mrf.mxu0
  %v1652 = vadd.f32 %v1491, %v1651
  %v1653 = vpop.f32.mrf.mxu0
  %v1654 = vadd.f32 %v1493, %v1653
  %1655 = vmatprep.mubr.f32.mxu0 %v886
  %1656 = vmatmul.mubr.f32.gmra.mxu0 %v885
  %v1657 = vpop.f32.mrf.mxu0
  %v1658 = vadd.f32 %v1497, %v1657
  %v1659 = vpop.f32.mrf.mxu0
  %v1660 = vadd.f32 %v1499, %v1659
  %1661 = vmatprep.mubr.f32.mxu0 %v899
  %1662 = vmatmul.mubr.f32.gmra.mxu0 %v898
  %v1663 = vpop.f32.mrf.mxu0
  %v1664 = vadd.f32 %v1503, %v1663
  %v1665 = vpop.f32.mrf.mxu0
  %v1666 = vadd.f32 %v1505, %v1665
  %1667 = vmatprep.mubr.f32.mxu0 %v912
  %1668 = vmatmul.mubr.f32.gmra.mxu0 %v911
  %v1669 = vpop.f32.mrf.mxu0
  %v1670 = vadd.f32 %v1509, %v1669
  %v1671 = vpop.f32.mrf.mxu0
  %v1672 = vadd.f32 %v1511, %v1671
  %1673 = vmatprep.mubr.f32.mxu0 %v925
  %1674 = vmatmul.mubr.f32.gmra.mxu0 %v924
  %v1675 = vpop.f32.mrf.mxu0
  %v1676 = vadd.f32 %v1515, %v1675
  %v1677 = vpop.f32.mrf.mxu0
  %v1678 = vadd.f32 %v1517, %v1677
  %1679 = vmatprep.mubr.f32.mxu0 %v938
  %1680 = vmatmul.mubr.f32.gmra.mxu0 %v937
  %v1681 = vpop.f32.mrf.mxu0
  %v1682 = vadd.f32 %v1521, %v1681
  %v1683 = vpop.f32.mrf.mxu0
  %v1684 = vadd.f32 %v1523, %v1683
  %1685 = vmatprep.mubr.f32.mxu0 %v951
  %1686 = vmatmul.mubr.f32.gmra.mxu0 %v950
  %v1687 = vpop.f32.mrf.mxu0
  %v1688 = vadd.f32 %v1527, %v1687
  %v1689 = vpop.f32.mrf.mxu0
  %v1690 = vadd.f32 %v1529, %v1689
  %1691 = vmatprep.mubr.f32.mxu0 %v964
  %1692 = vmatmul.mubr.f32.gmra.mxu0 %v963
  %v1693 = vpop.f32.mrf.mxu0
  %v1694 = vadd.f32 %v1533, %v1693
  %v1695 = vpop.f32.mrf.mxu0
  %v1696 = vadd.f32 %v1535, %v1695
  %1697 = vmatprep.mubr.f32.mxu0 %v977
  %1698 = vmatmul.mubr.f32.gmra.mxu0 %v976
  %v1699 = vpop.f32.mrf.mxu0
  %v1700 = vadd.f32 %v1539, %v1699
  %v1701 = vpop.f32.mrf.mxu0
  %v1702 = vadd.f32 %v1541, %v1701
  %1703 = vmatprep.mubr.f32.mxu0 %v990
  %1704 = vmatmul.mubr.f32.gmra.mxu0 %v989
  %v1705 = vpop.f32.mrf.mxu0
  %v1706 = vadd.f32 %v1545, %v1705
  %v1707 = vpop.f32.mrf.mxu0
  %v1708 = vadd.f32 %v1547, %v1707
  %1709 = vmatprep.mubr.f32.mxu0 %v1003
  %1710 = vmatmul.mubr.f32.gmra.mxu0 %v1002
  %v1711 = vpop.f32.mrf.mxu0
  %v1712 = vadd.f32 %v1551, %v1711
  %v1713 = vpop.f32.mrf.mxu0
  %v1714 = vadd.f32 %v1553, %v1713
  %1715 = vmatprep.mubr.f32.mxu0 %v1016
  %1716 = vmatmul.mubr.f32.gmra.mxu0 %v1015
  %v1717 = vpop.f32.mrf.mxu0
  %v1718 = vadd.f32 %v1557, %v1717
  %v1719 = vpop.f32.mrf.mxu0
  %v1720 = vadd.f32 %v1559, %v1719
  %1721 = vmatprep.mubr.f32.mxu0 %v1029
  %1722 = vmatmul.mubr.f32.gmra.mxu0 %v1028
  %v1723 = vpop.f32.mrf.mxu0
  %v1724 = vadd.f32 %v1563, %v1723
  %v1725 = vpop.f32.mrf.mxu0
  %v1726 = vadd.f32 %v1565, %v1725
  %1727 = vdwg.mxu0
  %1728 = vmatprep.subr.mxu0 %v706
  %1729 = vmatpush1.msra.mxu0 %v705
  %1730 = vmatprep.subr.mxu0 %v704
  %1731 = vmatpush1.msra.mxu0 %v703
  %1732 = vmatprep.subr.mxu0 %v702
  %1733 = vmatpush1.msra.mxu0 %v701
  %1734 = vmatprep.subr.mxu0 %v700
  %1735 = vmatpush1.msra.mxu0 %v699
  %1736 = vmatprep.subr.mxu0 %v698
  %1737 = vmatpush1.msra.mxu0 %v697
  %1738 = vmatprep.subr.mxu0 %v696
  %1739 = vmatpush1.msra.mxu0 %v695
  %1740 = vmatprep.subr.mxu0 %v694
  %1741 = vmatpush1.msra.mxu0 %v693
  %1742 = vmatprep.subr.mxu0 %v692
  %1743 = vmatpush1.msra.mxu0 %v691
  %1744 = vmatprep.subr.mxu0 %v690
  %1745 = vmatpush1.msra.mxu0 %v689
  %1746 = vmatprep.subr.mxu0 %v688
  %1747 = vmatpush1.msra.mxu0 %v687
  %1748 = vmatprep.subr.mxu0 %v686
  %1749 = vmatpush1.msra.mxu0 %v685
  %1750 = vmatprep.subr.mxu0 %v684
  %1751 = vmatpush1.msra.mxu0 %v683
  %1752 = vmatprep.subr.mxu0 %v682
  %1753 = vmatpush1.msra.mxu0 %v681
  %1754 = vmatprep.subr.mxu0 %v680
  %1755 = vmatpush1.msra.mxu0 %v679
  %1756 = vmatprep.subr.mxu0 %v678
  %1757 = vmatpush1.msra.mxu0 %v677
  %1758 = vmatprep.subr.mxu0 %v676
  %1759 = vmatpush1.msra.mxu0 %v675
  %1760 = vmatprep.subr.mxu0 %v738
  %1761 = vmatpush2.msra.mxu0 %v737
  %1762 = vmatprep.subr.mxu0 %v736
  %1763 = vmatpush2.msra.mxu0 %v735
  %1764 = vmatprep.subr.mxu0 %v734
  %1765 = vmatpush2.msra.mxu0 %v733
  %1766 = vmatprep.subr.mxu0 %v732
  %1767 = vmatpush2.msra.mxu0 %v731
  %1768 = vmatprep.subr.mxu0 %v730
  %1769 = vmatpush2.msra.mxu0 %v729
  %1770 = vmatprep.subr.mxu0 %v728
  %1771 = vmatpush2.msra.mxu0 %v727
  %1772 = vmatprep.subr.mxu0 %v726
  %1773 = vmatpush2.msra.mxu0 %v725
  %1774 = vmatprep.subr.mxu0 %v724
  %1775 = vmatpush2.msra.mxu0 %v723
  %1776 = vmatprep.subr.mxu0 %v722
  %1777 = vmatpush2.msra.mxu0 %v721
  %1778 = vmatprep.subr.mxu0 %v720
  %1779 = vmatpush2.msra.mxu0 %v719
  %1780 = vmatprep.subr.mxu0 %v718
  %1781 = vmatpush2.msra.mxu0 %v717
  %1782 = vmatprep.subr.mxu0 %v716
  %1783 = vmatpush2.msra.mxu0 %v715
  %1784 = vmatprep.subr.mxu0 %v714
  %1785 = vmatpush2.msra.mxu0 %v713
  %1786 = vmatprep.subr.mxu0 %v712
  %1787 = vmatpush2.msra.mxu0 %v711
  %1788 = vmatprep.subr.mxu0 %v710
  %1789 = vmatpush2.msra.mxu0 %v709
  %1790 = vmatprep.subr.mxu0 %v708
  %1791 = vmatpush2.msra.mxu0 %v707
  %1792 = vmatprep.mubr.f32.mxu0 %v836
  %1793 = vmatmul.mubr.f32.gmra.mxu0 %v835
  %v1794 = vpop.f32.mrf.mxu0
  %v1795 = vadd.f32 %v1634, %v1794
  %v1796 = vpop.f32.mrf.mxu0
  %v1797 = vadd.f32 %v1636, %v1796
  %1798 = vmatprep.mubr.f32.mxu0 %v849
  %1799 = vmatmul.mubr.f32.gmra.mxu0 %v848
  %v1800 = vpop.f32.mrf.mxu0
  %v1801 = vadd.f32 %v1640, %v1800
  %v1802 = vpop.f32.mrf.mxu0
  %v1803 = vadd.f32 %v1642, %v1802
  %1804 = vmatprep.mubr.f32.mxu0 %v862
  %1805 = vmatmul.mubr.f32.gmra.mxu0 %v861
  %v1806 = vpop.f32.mrf.mxu0
  %v1807 = vadd.f32 %v1646, %v1806
  %v1808 = vpop.f32.mrf.mxu0
  %v1809 = vadd.f32 %v1648, %v1808
  %1810 = vmatprep.mubr.f32.mxu0 %v875
  %1811 = vmatmul.mubr.f32.gmra.mxu0 %v874
  %v1812 = vpop.f32.mrf.mxu0
  %v1813 = vadd.f32 %v1652, %v1812
  %v1814 = vpop.f32.mrf.mxu0
  %v1815 = vadd.f32 %v1654, %v1814
  %1816 = vmatprep.mubr.f32.mxu0 %v888
  %1817 = vmatmul.mubr.f32.gmra.mxu0 %v887
  %v1818 = vpop.f32.mrf.mxu0
  %v1819 = vadd.f32 %v1658, %v1818
  %v1820 = vpop.f32.mrf.mxu0
  %v1821 = vadd.f32 %v1660, %v1820
  %1822 = vmatprep.mubr.f32.mxu0 %v901
  %1823 = vmatmul.mubr.f32.gmra.mxu0 %v900
  %v1824 = vpop.f32.mrf.mxu0
  %v1825 = vadd.f32 %v1664, %v1824
  %v1826 = vpop.f32.mrf.mxu0
  %v1827 = vadd.f32 %v1666, %v1826
  %1828 = vmatprep.mubr.f32.mxu0 %v914
  %1829 = vmatmul.mubr.f32.gmra.mxu0 %v913
  %v1830 = vpop.f32.mrf.mxu0
  %v1831 = vadd.f32 %v1670, %v1830
  %v1832 = vpop.f32.mrf.mxu0
  %v1833 = vadd.f32 %v1672, %v1832
  %1834 = vmatprep.mubr.f32.mxu0 %v927
  %1835 = vmatmul.mubr.f32.gmra.mxu0 %v926
  %v1836 = vpop.f32.mrf.mxu0
  %v1837 = vadd.f32 %v1676, %v1836
  %v1838 = vpop.f32.mrf.mxu0
  %v1839 = vadd.f32 %v1678, %v1838
  %1840 = vmatprep.mubr.f32.mxu0 %v940
  %1841 = vmatmul.mubr.f32.gmra.mxu0 %v939
  %v1842 = vpop.f32.mrf.mxu0
  %v1843 = vadd.f32 %v1682, %v1842
  %v1844 = vpop.f32.mrf.mxu0
  %v1845 = vadd.f32 %v1684, %v1844
  %1846 = vmatprep.mubr.f32.mxu0 %v953
  %1847 = vmatmul.mubr.f32.gmra.mxu0 %v952
  %v1848 = vpop.f32.mrf.mxu0
  %v1849 = vadd.f32 %v1688, %v1848
  %v1850 = vpop.f32.mrf.mxu0
  %v1851 = vadd.f32 %v1690, %v1850
  %1852 = vmatprep.mubr.f32.mxu0 %v966
  %1853 = vmatmul.mubr.f32.gmra.mxu0 %v965
  %v1854 = vpop.f32.mrf.mxu0
  %v1855 = vadd.f32 %v1694, %v1854
  %v1856 = vpop.f32.mrf.mxu0
  %v1857 = vadd.f32 %v1696, %v1856
  %1858 = vmatprep.mubr.f32.mxu0 %v979
  %1859 = vmatmul.mubr.f32.gmra.mxu0 %v978
  %v1860 = vpop.f32.mrf.mxu0
  %v1861 = vadd.f32 %v1700, %v1860
  %v1862 = vpop.f32.mrf.mxu0
  %v1863 = vadd.f32 %v1702, %v1862
  %1864 = vmatprep.mubr.f32.mxu0 %v992
  %1865 = vmatmul.mubr.f32.gmra.mxu0 %v991
  %v1866 = vpop.f32.mrf.mxu0
  %v1867 = vadd.f32 %v1706, %v1866
  %v1868 = vpop.f32.mrf.mxu0
  %v1869 = vadd.f32 %v1708, %v1868
  %1870 = vmatprep.mubr.f32.mxu0 %v1005
  %1871 = vmatmul.mubr.f32.gmra.mxu0 %v1004
  %v1872 = vpop.f32.mrf.mxu0
  %v1873 = vadd.f32 %v1712, %v1872
  %v1874 = vpop.f32.mrf.mxu0
  %v1875 = vadd.f32 %v1714, %v1874
  %1876 = vmatprep.mubr.f32.mxu0 %v1018
  %1877 = vmatmul.mubr.f32.gmra.mxu0 %v1017
  %v1878 = vpop.f32.mrf.mxu0
  %v1879 = vadd.f32 %v1718, %v1878
  %v1880 = vpop.f32.mrf.mxu0
  %v1881 = vadd.f32 %v1720, %v1880
  %1882 = vmatprep.mubr.f32.mxu0 %v1031
  %1883 = vmatmul.mubr.f32.gmra.mxu0 %v1030
  %v1884 = vpop.f32.mrf.mxu0
  %v1885 = vadd.f32 %v1724, %v1884
  %v1886 = vpop.f32.mrf.mxu0
  %v1887 = vadd.f32 %v1726, %v1886
  %1888 = vdwg.mxu0
  %1889 = vmatprep.subr.mxu0 %v770
  %1890 = vmatpush1.msra.mxu0 %v769
  %1891 = vmatprep.subr.mxu0 %v768
  %1892 = vmatpush1.msra.mxu0 %v767
  %1893 = vmatprep.subr.mxu0 %v766
  %1894 = vmatpush1.msra.mxu0 %v765
  %1895 = vmatprep.subr.mxu0 %v764
  %1896 = vmatpush1.msra.mxu0 %v763
  %1897 = vmatprep.subr.mxu0 %v762
  %1898 = vmatpush1.msra.mxu0 %v761
  %1899 = vmatprep.subr.mxu0 %v760
  %1900 = vmatpush1.msra.mxu0 %v759
  %1901 = vmatprep.subr.mxu0 %v758
  %1902 = vmatpush1.msra.mxu0 %v757
  %1903 = vmatprep.subr.mxu0 %v756
  %1904 = vmatpush1.msra.mxu0 %v755
  %1905 = vmatprep.subr.mxu0 %v754
  %1906 = vmatpush1.msra.mxu0 %v753
  %1907 = vmatprep.subr.mxu0 %v752
  %1908 = vmatpush1.msra.mxu0 %v751
  %1909 = vmatprep.subr.mxu0 %v750
  %1910 = vmatpush1.msra.mxu0 %v749
  %1911 = vmatprep.subr.mxu0 %v748
  %1912 = vmatpush1.msra.mxu0 %v747
  %1913 = vmatprep.subr.mxu0 %v746
  %1914 = vmatpush1.msra.mxu0 %v745
  %1915 = vmatprep.subr.mxu0 %v744
  %1916 = vmatpush1.msra.mxu0 %v743
  %1917 = vmatprep.subr.mxu0 %v742
  %1918 = vmatpush1.msra.mxu0 %v741
  %1919 = vmatprep.subr.mxu0 %v740
  %1920 = vmatpush1.msra.mxu0 %v739
  %1921 = vmatprep.subr.mxu0 %v802
  %1922 = vmatpush2.msra.mxu0 %v801
  %1923 = vmatprep.subr.mxu0 %v800
  %1924 = vmatpush2.msra.mxu0 %v799
  %1925 = vmatprep.subr.mxu0 %v798
  %1926 = vmatpush2.msra.mxu0 %v797
  %1927 = vmatprep.subr.mxu0 %v796
  %1928 = vmatpush2.msra.mxu0 %v795
  %1929 = vmatprep.subr.mxu0 %v794
  %1930 = vmatpush2.msra.mxu0 %v793
  %1931 = vmatprep.subr.mxu0 %v792
  %1932 = vmatpush2.msra.mxu0 %v791
  %1933 = vmatprep.subr.mxu0 %v790
  %1934 = vmatpush2.msra.mxu0 %v789
  %1935 = vmatprep.subr.mxu0 %v788
  %1936 = vmatpush2.msra.mxu0 %v787
  %1937 = vmatprep.subr.mxu0 %v786
  %1938 = vmatpush2.msra.mxu0 %v785
  %1939 = vmatprep.subr.mxu0 %v784
  %1940 = vmatpush2.msra.mxu0 %v783
  %1941 = vmatprep.subr.mxu0 %v782
  %1942 = vmatpush2.msra.mxu0 %v781
  %1943 = vmatprep.subr.mxu0 %v780
  %1944 = vmatpush2.msra.mxu0 %v779
  %1945 = vmatprep.subr.mxu0 %v778
  %1946 = vmatpush2.msra.mxu0 %v777
  %1947 = vmatprep.subr.mxu0 %v776
  %1948 = vmatpush2.msra.mxu0 %v775
  %1949 = vmatprep.subr.mxu0 %v774
  %1950 = vmatpush2.msra.mxu0 %v773
  %1951 = vmatprep.subr.mxu0 %v772
  %1952 = vmatpush2.msra.mxu0 %v771
  %1953 = vmatprep.mubr.f32.mxu0 %v838
  %1954 = vmatmul.mubr.f32.gmra.mxu0 %v837
  %v1955 = vpop.f32.mrf.mxu0
  %v1956 = vadd.f32 %v1795, %v1955
  %v1957 = vpop.f32.mrf.mxu0
  %v1958 = vadd.f32 %v1797, %v1957
  %1959 = vmatprep.mubr.f32.mxu0 %v851
  %1960 = vmatmul.mubr.f32.gmra.mxu0 %v850
  %v1961 = vpop.f32.mrf.mxu0
  %v1962 = vadd.f32 %v1801, %v1961
  %v1963 = vpop.f32.mrf.mxu0
  %v1964 = vadd.f32 %v1803, %v1963
  %1965 = vmatprep.mubr.f32.mxu0 %v864
  %1966 = vmatmul.mubr.f32.gmra.mxu0 %v863
  %v1967 = vpop.f32.mrf.mxu0
  %v1968 = vadd.f32 %v1807, %v1967
  %v1969 = vpop.f32.mrf.mxu0
  %v1970 = vadd.f32 %v1809, %v1969
  %1971 = vmatprep.mubr.f32.mxu0 %v877
  %1972 = vmatmul.mubr.f32.gmra.mxu0 %v876
  %v1973 = vpop.f32.mrf.mxu0
  %v1974 = vadd.f32 %v1813, %v1973
  %v1975 = vpop.f32.mrf.mxu0
  %v1976 = vadd.f32 %v1815, %v1975
  %1977 = vmatprep.mubr.f32.mxu0 %v890
  %1978 = vmatmul.mubr.f32.gmra.mxu0 %v889
  %v1979 = vpop.f32.mrf.mxu0
  %v1980 = vadd.f32 %v1819, %v1979
  %v1981 = vpop.f32.mrf.mxu0
  %v1982 = vadd.f32 %v1821, %v1981
  %1983 = vmatprep.mubr.f32.mxu0 %v903
  %1984 = vmatmul.mubr.f32.gmra.mxu0 %v902
  %v1985 = vpop.f32.mrf.mxu0
  %v1986 = vadd.f32 %v1825, %v1985
  %v1987 = vpop.f32.mrf.mxu0
  %v1988 = vadd.f32 %v1827, %v1987
  %1989 = vmatprep.mubr.f32.mxu0 %v916
  %1990 = vmatmul.mubr.f32.gmra.mxu0 %v915
  %v1991 = vpop.f32.mrf.mxu0
  %v1992 = vadd.f32 %v1831, %v1991
  %v1993 = vpop.f32.mrf.mxu0
  %v1994 = vadd.f32 %v1833, %v1993
  %1995 = vmatprep.mubr.f32.mxu0 %v929
  %1996 = vmatmul.mubr.f32.gmra.mxu0 %v928
  %v1997 = vpop.f32.mrf.mxu0
  %v1998 = vadd.f32 %v1837, %v1997
  %v1999 = vpop.f32.mrf.mxu0
  %v2000 = vadd.f32 %v1839, %v1999
  %2001 = vmatprep.mubr.f32.mxu0 %v942
  %2002 = vmatmul.mubr.f32.gmra.mxu0 %v941
  %v2003 = vpop.f32.mrf.mxu0
  %v2004 = vadd.f32 %v1843, %v2003
  %v2005 = vpop.f32.mrf.mxu0
  %v2006 = vadd.f32 %v1845, %v2005
  %2007 = vmatprep.mubr.f32.mxu0 %v955
  %2008 = vmatmul.mubr.f32.gmra.mxu0 %v954
  %v2009 = vpop.f32.mrf.mxu0
  %v2010 = vadd.f32 %v1849, %v2009
  %v2011 = vpop.f32.mrf.mxu0
  %v2012 = vadd.f32 %v1851, %v2011
  %2013 = vmatprep.mubr.f32.mxu0 %v968
  %2014 = vmatmul.mubr.f32.gmra.mxu0 %v967
  %v2015 = vpop.f32.mrf.mxu0
  %v2016 = vadd.f32 %v1855, %v2015
  %v2017 = vpop.f32.mrf.mxu0
  %v2018 = vadd.f32 %v1857, %v2017
  %2019 = vmatprep.mubr.f32.mxu0 %v981
  %2020 = vmatmul.mubr.f32.gmra.mxu0 %v980
  %v2021 = vpop.f32.mrf.mxu0
  %v2022 = vadd.f32 %v1861, %v2021
  %v2023 = vpop.f32.mrf.mxu0
  %v2024 = vadd.f32 %v1863, %v2023
  %2025 = vmatprep.mubr.f32.mxu0 %v994
  %2026 = vmatmul.mubr.f32.gmra.mxu0 %v993
  %v2027 = vpop.f32.mrf.mxu0
  %v2028 = vadd.f32 %v1867, %v2027
  %v2029 = vpop.f32.mrf.mxu0
  %v2030 = vadd.f32 %v1869, %v2029
  %2031 = vmatprep.mubr.f32.mxu0 %v1007
  %2032 = vmatmul.mubr.f32.gmra.mxu0 %v1006
  %v2033 = vpop.f32.mrf.mxu0
  %v2034 = vadd.f32 %v1873, %v2033
  %v2035 = vpop.f32.mrf.mxu0
  %v2036 = vadd.f32 %v1875, %v2035
  %2037 = vmatprep.mubr.f32.mxu0 %v1020
  %2038 = vmatmul.mubr.f32.gmra.mxu0 %v1019
  %v2039 = vpop.f32.mrf.mxu0
  %v2040 = vadd.f32 %v1879, %v2039
  %v2041 = vpop.f32.mrf.mxu0
  %v2042 = vadd.f32 %v1881, %v2041
  %2043 = vmatprep.mubr.f32.mxu0 %v1033
  %2044 = vmatmul.mubr.f32.gmra.mxu0 %v1032
  %v2045 = vpop.f32.mrf.mxu0
  %v2046 = vadd.f32 %v1885, %v2045
  %v2047 = vpop.f32.mrf.mxu0
  %v2048 = vadd.f32 %v1887, %v2047
  %2049 = vdwg.mxu0
  %2050 = vmatprep.subr.mxu0 0.0
  %2051 = vmatpush1.msra.mxu0 0.0
  %2052 = vmatprep.subr.mxu0 0.0
  %2053 = vmatpush1.msra.mxu0 0.0
  %2054 = vmatprep.subr.mxu0 0.0
  %2055 = vmatpush1.msra.mxu0 0.0
  %2056 = vmatprep.subr.mxu0 0.0
  %2057 = vmatpush1.msra.mxu0 0.0
  %2058 = vmatprep.subr.mxu0 %v826
  %2059 = vmatpush1.msra.mxu0 %v825
  %2060 = vmatprep.subr.mxu0 %v824
  %2061 = vmatpush1.msra.mxu0 %v823
  %2062 = vmatprep.subr.mxu0 %v822
  %2063 = vmatpush1.msra.mxu0 %v821
  %2064 = vmatprep.subr.mxu0 %v820
  %2065 = vmatpush1.msra.mxu0 %v819
  %2066 = vmatprep.subr.mxu0 %v818
  %2067 = vmatpush1.msra.mxu0 %v817
  %2068 = vmatprep.subr.mxu0 %v816
  %2069 = vmatpush1.msra.mxu0 %v815
  %2070 = vmatprep.subr.mxu0 %v814
  %2071 = vmatpush1.msra.mxu0 %v813
  %2072 = vmatprep.subr.mxu0 %v812
  %2073 = vmatpush1.msra.mxu0 %v811
  %2074 = vmatprep.subr.mxu0 %v810
  %2075 = vmatpush1.msra.mxu0 %v809
  %2076 = vmatprep.subr.mxu0 %v808
  %2077 = vmatpush1.msra.mxu0 %v807
  %2078 = vmatprep.subr.mxu0 %v806
  %2079 = vmatpush1.msra.mxu0 %v805
  %2080 = vmatprep.subr.mxu0 %v804
  %2081 = vmatpush1.msra.mxu0 %v803
  %2082 = vmatprep.subr.mxu0 0.0
  %2083 = vmatpush2.msra.mxu0 0.0
  %2084 = vmatprep.subr.mxu0 0.0
  %2085 = vmatpush2.msra.mxu0 0.0
  %2086 = vmatprep.subr.mxu0 0.0
  %2087 = vmatpush2.msra.mxu0 0.0
  %2088 = vmatprep.subr.mxu0 0.0
  %2089 = vmatpush2.msra.mxu0 0.0
  %2090 = vmatprep.subr.mxu0 0.0
  %2091 = vmatpush2.msra.mxu0 0.0
  %2092 = vmatprep.subr.mxu0 0.0
  %2093 = vmatpush2.msra.mxu0 0.0
  %2094 = vmatprep.subr.mxu0 0.0
  %2095 = vmatpush2.msra.mxu0 0.0
  %2096 = vmatprep.subr.mxu0 0.0
  %2097 = vmatpush2.msra.mxu0 0.0
  %2098 = vmatprep.subr.mxu0 0.0
  %2099 = vmatpush2.msra.mxu0 0.0
  %2100 = vmatprep.subr.mxu0 0.0
  %2101 = vmatpush2.msra.mxu0 0.0
  %2102 = vmatprep.subr.mxu0 0.0
  %2103 = vmatpush2.msra.mxu0 0.0
  %2104 = vmatprep.subr.mxu0 0.0
  %2105 = vmatpush2.msra.mxu0 0.0
  %2106 = vmatprep.subr.mxu0 0.0
  %2107 = vmatpush2.msra.mxu0 0.0
  %2108 = vmatprep.subr.mxu0 0.0
  %2109 = vmatpush2.msra.mxu0 0.0
  %2110 = vmatprep.subr.mxu0 0.0
  %2111 = vmatpush2.msra.mxu0 0.0
  %2112 = vmatprep.subr.mxu0 0.0
  %2113 = vmatpush2.msra.mxu0 0.0
  %2114 = vmatprep.mubr.f32.mxu0 0.0
  %2115 = vmatmul.mubr.f32.gmra.mxu0 %v1037
  %v2116 = vpop.f32.mrf.mxu0
  %v2117 = vadd.f32 %v1956, %v2116
  %v2118 = vpop.f32.mrf.mxu0
  %v2119 = vadd.f32 %v1958, %v2118
  %2120 = vmatprep.mubr.f32.mxu0 0.0
  %2121 = vmatmul.mubr.f32.gmra.mxu0 %v1040
  %v2122 = vpop.f32.mrf.mxu0
  %v2123 = vadd.f32 %v1962, %v2122
  %v2124 = vpop.f32.mrf.mxu0
  %v2125 = vadd.f32 %v1964, %v2124
  %2126 = vmatprep.mubr.f32.mxu0 0.0
  %2127 = vmatmul.mubr.f32.gmra.mxu0 %v1043
  %v2128 = vpop.f32.mrf.mxu0
  %v2129 = vadd.f32 %v1968, %v2128
  %v2130 = vpop.f32.mrf.mxu0
  %v2131 = vadd.f32 %v1970, %v2130
  %2132 = vmatprep.mubr.f32.mxu0 0.0
  %2133 = vmatmul.mubr.f32.gmra.mxu0 %v1046
  %v2134 = vpop.f32.mrf.mxu0
  %v2135 = vadd.f32 %v1974, %v2134
  %v2136 = vpop.f32.mrf.mxu0
  %v2137 = vadd.f32 %v1976, %v2136
  %2138 = vmatprep.mubr.f32.mxu0 0.0
  %2139 = vmatmul.mubr.f32.gmra.mxu0 %v1049
  %v2140 = vpop.f32.mrf.mxu0
  %v2141 = vadd.f32 %v1980, %v2140
  %v2142 = vpop.f32.mrf.mxu0
  %v2143 = vadd.f32 %v1982, %v2142
  %2144 = vmatprep.mubr.f32.mxu0 0.0
  %2145 = vmatmul.mubr.f32.gmra.mxu0 %v1052
  %v2146 = vpop.f32.mrf.mxu0
  %v2147 = vadd.f32 %v1986, %v2146
  %v2148 = vpop.f32.mrf.mxu0
  %v2149 = vadd.f32 %v1988, %v2148
  %2150 = vmatprep.mubr.f32.mxu0 0.0
  %2151 = vmatmul.mubr.f32.gmra.mxu0 %v1055
  %v2152 = vpop.f32.mrf.mxu0
  %v2153 = vadd.f32 %v1992, %v2152
  %v2154 = vpop.f32.mrf.mxu0
  %v2155 = vadd.f32 %v1994, %v2154
  %2156 = vmatprep.mubr.f32.mxu0 0.0
  %2157 = vmatmul.mubr.f32.gmra.mxu0 %v1058
  %v2158 = vpop.f32.mrf.mxu0
  %v2159 = vadd.f32 %v1998, %v2158
  %v2160 = vpop.f32.mrf.mxu0
  %v2161 = vadd.f32 %v2000, %v2160
  %2162 = vmatprep.mubr.f32.mxu0 0.0
  %2163 = vmatmul.mubr.f32.gmra.mxu0 %v1061
  %v2164 = vpop.f32.mrf.mxu0
  %v2165 = vadd.f32 %v2004, %v2164
  %v2166 = vpop.f32.mrf.mxu0
  %v2167 = vadd.f32 %v2006, %v2166
  %2168 = vmatprep.mubr.f32.mxu0 0.0
  %2169 = vmatmul.mubr.f32.gmra.mxu0 %v1064
  %v2170 = vpop.f32.mrf.mxu0
  %v2171 = vadd.f32 %v2010, %v2170
  %v2172 = vpop.f32.mrf.mxu0
  %v2173 = vadd.f32 %v2012, %v2172
  %2174 = vmatprep.mubr.f32.mxu0 0.0
  %2175 = vmatmul.mubr.f32.gmra.mxu0 %v1067
  %v2176 = vpop.f32.mrf.mxu0
  %v2177 = vadd.f32 %v2016, %v2176
  %v2178 = vpop.f32.mrf.mxu0
  %v2179 = vadd.f32 %v2018, %v2178
  %2180 = vmatprep.mubr.f32.mxu0 0.0
  %2181 = vmatmul.mubr.f32.gmra.mxu0 %v1070
  %v2182 = vpop.f32.mrf.mxu0
  %v2183 = vadd.f32 %v2022, %v2182
  %v2184 = vpop.f32.mrf.mxu0
  %v2185 = vadd.f32 %v2024, %v2184
  %2186 = vmatprep.mubr.f32.mxu0 0.0
  %2187 = vmatmul.mubr.f32.gmra.mxu0 %v1073
  %v2188 = vpop.f32.mrf.mxu0
  %v2189 = vadd.f32 %v2028, %v2188
  %v2190 = vpop.f32.mrf.mxu0
  %v2191 = vadd.f32 %v2030, %v2190
  %2192 = vmatprep.mubr.f32.mxu0 0.0
  %2193 = vmatmul.mubr.f32.gmra.mxu0 %v1076
  %v2194 = vpop.f32.mrf.mxu0
  %v2195 = vadd.f32 %v2034, %v2194
  %v2196 = vpop.f32.mrf.mxu0
  %v2197 = vadd.f32 %v2036, %v2196
  %2198 = vmatprep.mubr.f32.mxu0 0.0
  %2199 = vmatmul.mubr.f32.gmra.mxu0 %v1079
  %v2200 = vpop.f32.mrf.mxu0
  %v2201 = vadd.f32 %v2040, %v2200
  %v2202 = vpop.f32.mrf.mxu0
  %v2203 = vadd.f32 %v2042, %v2202
  %2204 = vmatprep.mubr.f32.mxu0 0.0
  %2205 = vmatmul.mubr.f32.gmra.mxu0 %v1082
  %v2206 = vpop.f32.mrf.mxu0
  %v2207 = vadd.f32 %v2046, %v2206
  %v2208 = vpop.f32.mrf.mxu0
  %v2209 = vadd.f32 %v2048, %v2208
  %2210 = vdwg.mxu0
  %2211 = vst [vmem:[%s2] sm:$0xff] %v2117
  %vm2212 = vcmask 556032
  %2213 = vst.msk [vmem:[%s2 + $0x8] sm:$0xff] %vm2212, %v2119
  %2214 = vst [vmem:[%s2 + $0x10] sm:$0xff] %v2123
  %2215 = vst.msk [vmem:[%s2 + $0x18] sm:$0xff] %vm2212, %v2125
  %2216 = vst [vmem:[%s2 + $0x20] sm:$0xff] %v2129
  %2217 = vst.msk [vmem:[%s2 + $0x28] sm:$0xff] %vm2212, %v2131
  %2218 = vst [vmem:[%s2 + $0x30] sm:$0xff] %v2135
  %2219 = vst.msk [vmem:[%s2 + $0x38] sm:$0xff] %vm2212, %v2137
  %2220 = vst [vmem:[%s2 + $0x40] sm:$0xff] %v2141
  %2221 = vst.msk [vmem:[%s2 + $0x48] sm:$0xff] %vm2212, %v2143
  %2222 = vst [vmem:[%s2 + $0x50] sm:$0xff] %v2147
  %2223 = vst.msk [vmem:[%s2 + $0x58] sm:$0xff] %vm2212, %v2149
  %2224 = vst [vmem:[%s2 + $0x60] sm:$0xff] %v2153
  %2225 = vst.msk [vmem:[%s2 + $0x68] sm:$0xff] %vm2212, %v2155
  %2226 = vst [vmem:[%s2 + $0x70] sm:$0xff] %v2159
  %2227 = vst.msk [vmem:[%s2 + $0x78] sm:$0xff] %vm2212, %v2161
  %2228 = vst [vmem:[%s2 + $0x80] sm:$0xff] %v2165
  %2229 = vst.msk [vmem:[%s2 + $0x88] sm:$0xff] %vm2212, %v2167
  %2230 = vst [vmem:[%s2 + $0x90] sm:$0xff] %v2171
  %2231 = vst.msk [vmem:[%s2 + $0x98] sm:$0xff] %vm2212, %v2173
  %2232 = vst [vmem:[%s2 + $0xa0] sm:$0xff] %v2177
  %2233 = vst.msk [vmem:[%s2 + $0xa8] sm:$0xff] %vm2212, %v2179
  %2234 = vst [vmem:[%s2 + $0xb0] sm:$0xff] %v2183
  %2235 = vst.msk [vmem:[%s2 + $0xb8] sm:$0xff] %vm2212, %v2185
  %2236 = vst [vmem:[%s2 + $0xc0] sm:$0xff] %v2189
  %2237 = vst.msk [vmem:[%s2 + $0xc8] sm:$0xff] %vm2212, %v2191
  %2238 = vst [vmem:[%s2 + $0xd0] sm:$0xff] %v2195
  %2239 = vst.msk [vmem:[%s2 + $0xd8] sm:$0xff] %vm2212, %v2197
  %2240 = vst [vmem:[%s2 + $0xe0] sm:$0xff] %v2201
  %2241 = vst.msk [vmem:[%s2 + $0xe8] sm:$0xff] %vm2212, %v2203
  %2242 = vst [vmem:[%s2 + $0xf0] sm:$0xff] %v2207
  %2243 = vst.msk [vmem:[%s2 + $0xf8] sm:$0xff] %vm2212, %v2209
  // Predicated region
  $region10: #{tpu_custom_call.1} parent=0 // pred_check
    _
  $region11: #{tpu_custom_call.1} parent=0 // pred_check_branch
    %2245 = sbr.rel (0) target = $region13
  $region12: #{tpu_custom_call.1} parent=0 // pred_region
    _
  $region13: #{tpu_custom_call.1} parent=0 // pred_fallthru
    _
  // Predicated region
  $region14: #{tpu_custom_call.1} parent=0 // pred_check
    _
  $region15: #{tpu_custom_call.1} parent=0 // pred_check_branch
    %2247 = sbr.rel (0) target = $region17
  $region16: #{tpu_custom_call.1} parent=0 // pred_region
    _
  $region17: #{tpu_custom_call.1} parent=0 // pred_fallthru
    _

</llo_original>
